<compile_context>
chip_gen: v7x
topology: tpu7x:2x2x1
jax: 0.10.0
libtpu: 0.0.40
codegen_flags: <defaults>
</compile_context>

<pallas_src>
import functools

import jax
import jax.numpy as jnp
from jax.experimental import pallas as pl
from jax.experimental.pallas import tpu as pltpu


def _round_up(a, b):
    return (a + b - 1) // b * b


def _lstm_recurrence_kernel(gx_ref, whh_ref, hout_ref, h_ref, c_ref):
    """One grid step == TT timesteps for one batch tile.

    gx_ref  : (TT, BG, 4*Hp) precomputed input-side gate pre-activations (+bias)
    whh_ref : (Hp, 4*Hp)     recurrent weights, per-gate lane-aligned layout
    hout_ref: (TT, BG, Hp)   hidden states written out per timestep
    h_ref/c_ref: (BG, Hp)    f32 state carried across the time grid axis
    """
    tblk = pl.program_id(1)          # time-block index (innermost, "arbitrary")

    @pl.when(tblk == 0)
    def _():
        h_ref[...] = jnp.zeros_like(h_ref)
        c_ref[...] = jnp.zeros_like(c_ref)

    n_steps = gx_ref.shape[0]
    hp = h_ref.shape[1]
    whh = whh_ref[...]               # resident in VMEM for the whole block

    def step(tt, carry):
        h, c = carry
        # Only recurrence-dependent matmul left in the sequential loop.
        gates = gx_ref[tt] + jnp.dot(h, whh, preferred_element_type=jnp.float32)
        # Lane-aligned gate slices (hp is a multiple of 128).
        gate_i = jax.nn.sigmoid(gates[:, 0 * hp:1 * hp])
        gate_f = jax.nn.sigmoid(gates[:, 1 * hp:2 * hp])
        gate_g = jnp.tanh(gates[:, 2 * hp:3 * hp])
        gate_o = jax.nn.sigmoid(gates[:, 3 * hp:4 * hp])
        c = gate_f * c + gate_i * gate_g
        h = gate_o * jnp.tanh(c)
        hout_ref[tt] = h
        return h, c

    h, c = jax.lax.fori_loop(0, n_steps, step, (h_ref[...], c_ref[...]),
                             unroll=True)
    h_ref[...] = h
    c_ref[...] = c


@functools.partial(jax.jit, static_argnames=("block_t", "block_ngrid"))
def cpu_lstm_model_pallas(x, w_in, b_in, w_ih, b_ih, w_hh, b_hh, w_out, b_out,
                          *, block_t=8, block_ngrid=128):
    """x: (nt, ngrid, nx) float32.  Weights use PyTorch conventions:
       w_in (H, nx), w_ih (4H, H), w_hh (4H, H), w_out (ny, H)."""
    nt, ngrid, nx = x.shape
    H = w_hh.shape[1]
    ny = w_out.shape[0]

    Hp = _round_up(max(H, 128), 128)                 # lane-aligned hidden width
    BG = min(block_ngrid, _round_up(ngrid, 8))       # batch tile (sublane mult.)
    ngrid_p = _round_up(ngrid, BG)
    TT = min(block_t, nt)                            # timesteps per grid step
    nt_p = _round_up(nt, TT)

    hi = jax.lax.Precision.HIGHEST

    # ---- Hoisted, recurrence-independent GEMMs (big batched matmuls) --------
    x0 = jax.nn.relu(jnp.einsum('tbi,hi->tbh', x, w_in, precision=hi) + b_in)
    gates_x = (jnp.einsum('tbh,gh->tbg', x0, w_ih, precision=hi)
               + (b_ih + b_hh))                      # (nt, ngrid, 4H), bias folded

    # Re-layout so each gate occupies its own lane-aligned Hp-wide block, then
    # zero-pad time / batch / hidden. Zero padding keeps padded state at 0.
    gates_x = gates_x.reshape(nt, ngrid, 4, H)
    gates_x = jnp.pad(gates_x, ((0, nt_p - nt), (0, ngrid_p - ngrid),
                                (0, 0), (0, Hp - H)))
    gates_x = gates_x.reshape(nt_p, ngrid_p, 4 * Hp)

    # w_hh^T with the matching per-gate lane-aligned layout: (Hp, 4*Hp).
    whh_t = jnp.transpose(w_hh.reshape(4, H, H), (2, 0, 1))   # (H, 4, H)
    whh_t = jnp.pad(whh_t, ((0, Hp - H), (0, 0), (0, Hp - H)))
    whh_t = whh_t.reshape(Hp, 4 * Hp)

    grid = (ngrid_p // BG, nt_p // TT)   # (parallel batch tiles, sequential time)
    grid_spec = pltpu.PrefetchScalarGridSpec(
        num_scalar_prefetch=0,
        grid=grid,
        in_specs=[
            pl.BlockSpec((TT, BG, 4 * Hp), lambda b, t: (t, b, 0)),  # gates_x
            pl.BlockSpec((Hp, 4 * Hp), lambda b, t: (0, 0)),         # w_hh^T
        ],
        out_specs=pl.BlockSpec((TT, BG, Hp), lambda b, t: (t, b, 0)),
        scratch_shapes=[
            pltpu.VMEM((BG, Hp), jnp.float32),   # h state
            pltpu.VMEM((BG, Hp), jnp.float32),   # c state
        ],
    )

    h_all = pl.pallas_call(
        _lstm_recurrence_kernel,
        out_shape=jax.ShapeDtypeStruct((nt_p, ngrid_p, Hp), jnp.float32),
        grid_spec=grid_spec,
        compiler_params=pltpu.CompilerParams(
            dimension_semantics=("parallel", "arbitrary"),
            vmem_limit_bytes=48 * 1024 * 1024),
    )(gates_x, whh_t)

    # ---- Hoisted output projection (one big GEMM) ---------------------------
    h_all = h_all[:nt, :ngrid, :H]
    return jnp.einsum('tbh,oh->tbo', h_all, w_out, precision=hi) + b_out


def cpu_lstm_model_ref(x, w_in, b_in, w_ih, b_ih, w_hh, b_hh, w_out, b_out):
    """Pure-JAX reference (mirrors the PyTorch forward, eval mode)."""
    nt, ngrid, nx = x.shape
    H = w_hh.shape[1]

    def step(carry, xt):
        h, c = carry
        x0 = jax.nn.relu(xt @ w_in.T + b_in)
        gates = x0 @ w_ih.T + b_ih + h @ w_hh.T + b_hh
        gi, gf, gg, go = jnp.split(gates, 4, axis=1)
        c1 = jax.nn.sigmoid(gf) * c + jax.nn.sigmoid(gi) * jnp.tanh(gg)
        h1 = jax.nn.sigmoid(go) * jnp.tanh(c1)
        y = h1 @ w_out.T + b_out
        return (h1, c1), y

    h0 = jnp.zeros((ngrid, H), jnp.float32)
    c0 = jnp.zeros((ngrid, H), jnp.float32)
    _, ys = jax.lax.scan(step, (h0, c0), x)
    return ys


if __name__ == "__main__":
    # Small shapes consistent with the module's forward: x is (nt, ngrid, nx).
    # nt deliberately not a multiple of block_t and ngrid not a multiple of 8
    # so the padding paths are exercised.
    nt, ngrid, nx, H, ny = 12, 20, 8, 32, 2

    key = jax.random.PRNGKey(0)
    ks = jax.random.split(key, 10)

    # Deterministic init mimicking the PyTorch module's reset_parameters:
    #  - nn.Linear: U(-1/sqrt(fan_in), 1/sqrt(fan_in))
    #  - LstmCellTied: U(-1/sqrt(hidden), 1/sqrt(hidden))
    def uni(k, shape, bound):
        return jax.random.uniform(k, shape, jnp.float32, -bound, bound)

    b_lin_in = 1.0 / (nx ** 0.5)
    b_lstm = 1.0 / (H ** 0.5)
    b_lin_out = 1.0 / (H ** 0.5)

    w_in = uni(ks[0], (H, nx), b_lin_in)
    b_in = uni(ks[1], (H,), b_lin_in)
    w_ih = uni(ks[2], (4 * H, H), b_lstm)
    w_hh = uni(ks[3], (4 * H, H), b_lstm)
    b_ih = uni(ks[4], (4 * H,), b_lstm)
    b_hh = uni(ks[5], (4 * H,), b_lstm)
    w_out = uni(ks[6], (ny, H), b_lin_out)
    b_out = uni(ks[7], (ny,), b_lin_out)

    x = jax.random.normal(ks[8], (nt, ngrid, nx), jnp.float32)

    out = cpu_lstm_model_pallas(x, w_in, b_in, w_ih, b_ih, w_hh, b_hh,
                                w_out, b_out)
    out = jax.block_until_ready(out)

    ref = cpu_lstm_model_ref(x, w_in, b_in, w_ih, b_ih, w_hh, b_hh, w_out, b_out)
    assert out.shape == (nt, ngrid, ny)
    assert jnp.allclose(out, ref, atol=1e-4, rtol=1e-4), (
        f"max abs err {jnp.max(jnp.abs(out - ref))}")

    print("KERNEL_OK")
</pallas_src>

<mosaic_0001>
module attributes {stable_mosaic.version = 11 : i64} {
  func.func @_lstm_recurrence_kernel(%arg0: i32, %arg1: i32, %arg2: memref<8x24x512xf32, #tpu.memory_space<vmem>>, %arg3: memref<128x512xf32, #tpu.memory_space<vmem>>, %arg4: memref<8x24x128xf32, #tpu.memory_space<vmem>>, %arg5: memref<24x128xf32, #tpu.memory_space<vmem>>, %arg6: memref<24x128xf32, #tpu.memory_space<vmem>>) attributes {dimension_semantics = [#tpu.dimension_semantics<parallel>, #tpu.dimension_semantics<arbitrary>], iteration_bounds = array<i64: 1, 2>, scalar_prefetch = 0 : i64, scratch_operands = 2 : i64, tpu.core_type = #tpu.core_type<tc>, window_params = [{transform_indices = @transform_0, window_bounds = array<i64: 8, 24, 512>}, {pipeline_mode = #tpu.pipeline_mode<synchronous>, transform_indices = @transform_1, window_bounds = array<i64: 128, 512>}, {transform_indices = @transform_2, window_bounds = array<i64: 8, 24, 128>}]} {
    %c0_i32 = arith.constant 0 : i32
    %0 = arith.cmpi eq, %arg1, %c0_i32 : i32
    %1 = arith.extui %0 : i1 to i32
    %c0_i32_0 = arith.constant 0 : i32
    %2 = arith.cmpi ne, %1, %c0_i32_0 : i32
    scf.if %2 {
      %cst_74 = arith.constant 0.000000e+00 : f32
      %280 = vector.broadcast %cst_74 : f32 to vector<24x128xf32>
      %c0_75 = arith.constant 0 : index
      %c0_76 = arith.constant 0 : index
      %281 = vector.load %arg5[%c0_75, %c0_76] : memref<24x128xf32, #tpu.memory_space<vmem>>, vector<24x128xf32>
      tpu.vector_store %arg5[%c0_75, %c0_76], %280 {strides = array<i32>} : memref<24x128xf32, #tpu.memory_space<vmem>>, vector<24x128xf32>,
      %cst_77 = arith.constant 0.000000e+00 : f32
      %282 = vector.broadcast %cst_77 : f32 to vector<24x128xf32>
      %c0_78 = arith.constant 0 : index
      %c0_79 = arith.constant 0 : index
      %283 = vector.load %arg6[%c0_78, %c0_79] : memref<24x128xf32, #tpu.memory_space<vmem>>, vector<24x128xf32>
      tpu.vector_store %arg6[%c0_78, %c0_79], %282 {strides = array<i32>} : memref<24x128xf32, #tpu.memory_space<vmem>>, vector<24x128xf32>,
    } else {
    }
    %c0 = arith.constant 0 : index
    %c0_1 = arith.constant 0 : index
    %3 = vector.load %arg3[%c0, %c0_1] : memref<128x512xf32, #tpu.memory_space<vmem>>, vector<128x512xf32>
    %c0_2 = arith.constant 0 : index
    %c0_3 = arith.constant 0 : index
    %4 = vector.load %arg5[%c0_2, %c0_3] : memref<24x128xf32, #tpu.memory_space<vmem>>, vector<24x128xf32>
    %c0_4 = arith.constant 0 : index
    %c0_5 = arith.constant 0 : index
    %5 = vector.load %arg6[%c0_4, %c0_5] : memref<24x128xf32, #tpu.memory_space<vmem>>, vector<24x128xf32>
    %c0_i32_6 = arith.constant 0 : i32
    %6 = arith.index_cast %c0_i32_6 : i32 to index
    %c0_7 = arith.constant 0 : index
    %c0_8 = arith.constant 0 : index
    %7 = vector.load %arg2[%6, %c0_7, %c0_8] : memref<8x24x512xf32, #tpu.memory_space<vmem>>, vector<1x24x512xf32>
    %8 = vector.shape_cast %7 : vector<1x24x512xf32> to vector<24x512xf32>
    %cst = arith.constant dense<0.000000e+00> : vector<24x512xf32>
    %9 = tpu.matmul %4, %3, %cst {dimension_numbers = #tpu.dot_dimension_numbers<[1], [0], [0], [1], [0, 0, 1, 1], [], []>} : vector<24x128xf32>, vector<128x512xf32>, vector<24x512xf32> -> vector<24x512xf32>
    %10 = arith.addf %8, %9 : vector<24x512xf32>
    %11 = vector.extract_strided_slice %10 {offsets = [0, 0], sizes = [24, 128], strides = [1, 1]} : vector<24x512xf32> to vector<24x128xf32>
    %12 = arith.negf %11 : vector<24x128xf32>
    %13 = math.exp %12 : vector<24x128xf32>
    %cst_9 = arith.constant 1.000000e+00 : f32
    %14 = vector.broadcast %cst_9 : f32 to vector<24x128xf32>
    %15 = arith.addf %14, %13 : vector<24x128xf32>
    %16 = arith.divf %14, %15 : vector<24x128xf32>
    %17 = vector.extract_strided_slice %10 {offsets = [0, 128], sizes = [24, 128], strides = [1, 1]} : vector<24x512xf32> to vector<24x128xf32>
    %18 = arith.negf %17 : vector<24x128xf32>
    %19 = math.exp %18 : vector<24x128xf32>
    %cst_10 = arith.constant 1.000000e+00 : f32
    %20 = vector.broadcast %cst_10 : f32 to vector<24x128xf32>
    %21 = arith.addf %20, %19 : vector<24x128xf32>
    %22 = arith.divf %20, %21 : vector<24x128xf32>
    %23 = vector.extract_strided_slice %10 {offsets = [0, 256], sizes = [24, 128], strides = [1, 1]} : vector<24x512xf32> to vector<24x128xf32>
    %24 = math.tanh %23 : vector<24x128xf32>
    %25 = vector.extract_strided_slice %10 {offsets = [0, 384], sizes = [24, 128], strides = [1, 1]} : vector<24x512xf32> to vector<24x128xf32>
    %26 = arith.negf %25 : vector<24x128xf32>
    %27 = math.exp %26 : vector<24x128xf32>
    %cst_11 = arith.constant 1.000000e+00 : f32
    %28 = vector.broadcast %cst_11 : f32 to vector<24x128xf32>
    %29 = arith.addf %28, %27 : vector<24x128xf32>
    %30 = arith.divf %28, %29 : vector<24x128xf32>
    %31 = arith.mulf %22, %5 : vector<24x128xf32>
    %32 = arith.mulf %16, %24 : vector<24x128xf32>
    %33 = arith.addf %31, %32 : vector<24x128xf32>
    %34 = math.tanh %33 : vector<24x128xf32>
    %35 = arith.mulf %30, %34 : vector<24x128xf32>
    %36 = arith.index_cast %c0_i32_6 : i32 to index
    %c0_12 = arith.constant 0 : index
    %c0_13 = arith.constant 0 : index
    %37 = vector.load %arg4[%36, %c0_12, %c0_13] : memref<8x24x128xf32, #tpu.memory_space<vmem>>, vector<1x24x128xf32>
    %38 = vector.shape_cast %37 : vector<1x24x128xf32> to vector<24x128xf32>
    %39 = vector.shape_cast %35 : vector<24x128xf32> to vector<1x24x128xf32>
    tpu.vector_store %arg4[%36, %c0_12, %c0_13], %39 {strides = array<i32>} : memref<8x24x128xf32, #tpu.memory_space<vmem>>, vector<1x24x128xf32>,
    %c1_i32 = arith.constant 1 : i32
    %40 = arith.index_cast %c1_i32 : i32 to index
    %c0_14 = arith.constant 0 : index
    %c0_15 = arith.constant 0 : index
    %41 = vector.load %arg2[%40, %c0_14, %c0_15] : memref<8x24x512xf32, #tpu.memory_space<vmem>>, vector<1x24x512xf32>
    %42 = vector.shape_cast %41 : vector<1x24x512xf32> to vector<24x512xf32>
    %cst_16 = arith.constant dense<0.000000e+00> : vector<24x512xf32>
    %43 = tpu.matmul %35, %3, %cst_16 {dimension_numbers = #tpu.dot_dimension_numbers<[1], [0], [0], [1], [0, 0, 1, 1], [], []>} : vector<24x128xf32>, vector<128x512xf32>, vector<24x512xf32> -> vector<24x512xf32>
    %44 = arith.addf %42, %43 : vector<24x512xf32>
    %45 = vector.extract_strided_slice %44 {offsets = [0, 0], sizes = [24, 128], strides = [1, 1]} : vector<24x512xf32> to vector<24x128xf32>
    %46 = arith.negf %45 : vector<24x128xf32>
    %47 = math.exp %46 : vector<24x128xf32>
    %cst_17 = arith.constant 1.000000e+00 : f32
    %48 = vector.broadcast %cst_17 : f32 to vector<24x128xf32>
    %49 = arith.addf %48, %47 : vector<24x128xf32>
    %50 = arith.divf %48, %49 : vector<24x128xf32>
    %51 = vector.extract_strided_slice %44 {offsets = [0, 128], sizes = [24, 128], strides = [1, 1]} : vector<24x512xf32> to vector<24x128xf32>
    %52 = arith.negf %51 : vector<24x128xf32>
    %53 = math.exp %52 : vector<24x128xf32>
    %cst_18 = arith.constant 1.000000e+00 : f32
    %54 = vector.broadcast %cst_18 : f32 to vector<24x128xf32>
    %55 = arith.addf %54, %53 : vector<24x128xf32>
    %56 = arith.divf %54, %55 : vector<24x128xf32>
    %57 = vector.extract_strided_slice %44 {offsets = [0, 256], sizes = [24, 128], strides = [1, 1]} : vector<24x512xf32> to vector<24x128xf32>
    %58 = math.tanh %57 : vector<24x128xf32>
    %59 = vector.extract_strided_slice %44 {offsets = [0, 384], sizes = [24, 128], strides = [1, 1]} : vector<24x512xf32> to vector<24x128xf32>
    %60 = arith.negf %59 : vector<24x128xf32>
    %61 = math.exp %60 : vector<24x128xf32>
    %cst_19 = arith.constant 1.000000e+00 : f32
    %62 = vector.broadcast %cst_19 : f32 to vector<24x128xf32>
    %63 = arith.addf %62, %61 : vector<24x128xf32>
    %64 = arith.divf %62, %63 : vector<24x128xf32>
    %65 = arith.mulf %56, %33 : vector<24x128xf32>
    %66 = arith.mulf %50, %58 : vector<24x128xf32>
    %67 = arith.addf %65, %66 : vector<24x128xf32>
    %68 = math.tanh %67 : vector<24x128xf32>
    %69 = arith.mulf %64, %68 : vector<24x128xf32>
    %70 = arith.index_cast %c1_i32 : i32 to index
    %c0_20 = arith.constant 0 : index
    %c0_21 = arith.constant 0 : index
    %71 = vector.load %arg4[%70, %c0_20, %c0_21] : memref<8x24x128xf32, #tpu.memory_space<vmem>>, vector<1x24x128xf32>
    %72 = vector.shape_cast %71 : vector<1x24x128xf32> to vector<24x128xf32>
    %73 = vector.shape_cast %69 : vector<24x128xf32> to vector<1x24x128xf32>
    tpu.vector_store %arg4[%70, %c0_20, %c0_21], %73 {strides = array<i32>} : memref<8x24x128xf32, #tpu.memory_space<vmem>>, vector<1x24x128xf32>,
    %c2_i32 = arith.constant 2 : i32
    %74 = arith.index_cast %c2_i32 : i32 to index
    %c0_22 = arith.constant 0 : index
    %c0_23 = arith.constant 0 : index
    %75 = vector.load %arg2[%74, %c0_22, %c0_23] : memref<8x24x512xf32, #tpu.memory_space<vmem>>, vector<1x24x512xf32>
    %76 = vector.shape_cast %75 : vector<1x24x512xf32> to vector<24x512xf32>
    %cst_24 = arith.constant dense<0.000000e+00> : vector<24x512xf32>
    %77 = tpu.matmul %69, %3, %cst_24 {dimension_numbers = #tpu.dot_dimension_numbers<[1], [0], [0], [1], [0, 0, 1, 1], [], []>} : vector<24x128xf32>, vector<128x512xf32>, vector<24x512xf32> -> vector<24x512xf32>
    %78 = arith.addf %76, %77 : vector<24x512xf32>
    %79 = vector.extract_strided_slice %78 {offsets = [0, 0], sizes = [24, 128], strides = [1, 1]} : vector<24x512xf32> to vector<24x128xf32>
    %80 = arith.negf %79 : vector<24x128xf32>
    %81 = math.exp %80 : vector<24x128xf32>
    %cst_25 = arith.constant 1.000000e+00 : f32
    %82 = vector.broadcast %cst_25 : f32 to vector<24x128xf32>
    %83 = arith.addf %82, %81 : vector<24x128xf32>
    %84 = arith.divf %82, %83 : vector<24x128xf32>
    %85 = vector.extract_strided_slice %78 {offsets = [0, 128], sizes = [24, 128], strides = [1, 1]} : vector<24x512xf32> to vector<24x128xf32>
    %86 = arith.negf %85 : vector<24x128xf32>
    %87 = math.exp %86 : vector<24x128xf32>
    %cst_26 = arith.constant 1.000000e+00 : f32
    %88 = vector.broadcast %cst_26 : f32 to vector<24x128xf32>
    %89 = arith.addf %88, %87 : vector<24x128xf32>
    %90 = arith.divf %88, %89 : vector<24x128xf32>
    %91 = vector.extract_strided_slice %78 {offsets = [0, 256], sizes = [24, 128], strides = [1, 1]} : vector<24x512xf32> to vector<24x128xf32>
    %92 = math.tanh %91 : vector<24x128xf32>
    %93 = vector.extract_strided_slice %78 {offsets = [0, 384], sizes = [24, 128], strides = [1, 1]} : vector<24x512xf32> to vector<24x128xf32>
    %94 = arith.negf %93 : vector<24x128xf32>
    %95 = math.exp %94 : vector<24x128xf32>
    %cst_27 = arith.constant 1.000000e+00 : f32
    %96 = vector.broadcast %cst_27 : f32 to vector<24x128xf32>
    %97 = arith.addf %96, %95 : vector<24x128xf32>
    %98 = arith.divf %96, %97 : vector<24x128xf32>
    %99 = arith.mulf %90, %67 : vector<24x128xf32>
    %100 = arith.mulf %84, %92 : vector<24x128xf32>
    %101 = arith.addf %99, %100 : vector<24x128xf32>
    %102 = math.tanh %101 : vector<24x128xf32>
    %103 = arith.mulf %98, %102 : vector<24x128xf32>
    %104 = arith.index_cast %c2_i32 : i32 to index
    %c0_28 = arith.constant 0 : index
    %c0_29 = arith.constant 0 : index
    %105 = vector.load %arg4[%104, %c0_28, %c0_29] : memref<8x24x128xf32, #tpu.memory_space<vmem>>, vector<1x24x128xf32>
    %106 = vector.shape_cast %105 : vector<1x24x128xf32> to vector<24x128xf32>
    %107 = vector.shape_cast %103 : vector<24x128xf32> to vector<1x24x128xf32>
    tpu.vector_store %arg4[%104, %c0_28, %c0_29], %107 {strides = array<i32>} : memref<8x24x128xf32, #tpu.memory_space<vmem>>, vector<1x24x128xf32>,
    %c3_i32 = arith.constant 3 : i32
    %108 = arith.index_cast %c3_i32 : i32 to index
    %c0_30 = arith.constant 0 : index
    %c0_31 = arith.constant 0 : index
    %109 = vector.load %arg2[%108, %c0_30, %c0_31] : memref<8x24x512xf32, #tpu.memory_space<vmem>>, vector<1x24x512xf32>
    %110 = vector.shape_cast %109 : vector<1x24x512xf32> to vector<24x512xf32>
    %cst_32 = arith.constant dense<0.000000e+00> : vector<24x512xf32>
    %111 = tpu.matmul %103, %3, %cst_32 {dimension_numbers = #tpu.dot_dimension_numbers<[1], [0], [0], [1], [0, 0, 1, 1], [], []>} : vector<24x128xf32>, vector<128x512xf32>, vector<24x512xf32> -> vector<24x512xf32>
    %112 = arith.addf %110, %111 : vector<24x512xf32>
    %113 = vector.extract_strided_slice %112 {offsets = [0, 0], sizes = [24, 128], strides = [1, 1]} : vector<24x512xf32> to vector<24x128xf32>
    %114 = arith.negf %113 : vector<24x128xf32>
    %115 = math.exp %114 : vector<24x128xf32>
    %cst_33 = arith.constant 1.000000e+00 : f32
    %116 = vector.broadcast %cst_33 : f32 to vector<24x128xf32>
    %117 = arith.addf %116, %115 : vector<24x128xf32>
    %118 = arith.divf %116, %117 : vector<24x128xf32>
    %119 = vector.extract_strided_slice %112 {offsets = [0, 128], sizes = [24, 128], strides = [1, 1]} : vector<24x512xf32> to vector<24x128xf32>
    %120 = arith.negf %119 : vector<24x128xf32>
    %121 = math.exp %120 : vector<24x128xf32>
    %cst_34 = arith.constant 1.000000e+00 : f32
    %122 = vector.broadcast %cst_34 : f32 to vector<24x128xf32>
    %123 = arith.addf %122, %121 : vector<24x128xf32>
    %124 = arith.divf %122, %123 : vector<24x128xf32>
    %125 = vector.extract_strided_slice %112 {offsets = [0, 256], sizes = [24, 128], strides = [1, 1]} : vector<24x512xf32> to vector<24x128xf32>
    %126 = math.tanh %125 : vector<24x128xf32>
    %127 = vector.extract_strided_slice %112 {offsets = [0, 384], sizes = [24, 128], strides = [1, 1]} : vector<24x512xf32> to vector<24x128xf32>
    %128 = arith.negf %127 : vector<24x128xf32>
    %129 = math.exp %128 : vector<24x128xf32>
    %cst_35 = arith.constant 1.000000e+00 : f32
    %130 = vector.broadcast %cst_35 : f32 to vector<24x128xf32>
    %131 = arith.addf %130, %129 : vector<24x128xf32>
    %132 = arith.divf %130, %131 : vector<24x128xf32>
    %133 = arith.mulf %124, %101 : vector<24x128xf32>
    %134 = arith.mulf %118, %126 : vector<24x128xf32>
    %135 = arith.addf %133, %134 : vector<24x128xf32>
    %136 = math.tanh %135 : vector<24x128xf32>
    %137 = arith.mulf %132, %136 : vector<24x128xf32>
    %138 = arith.index_cast %c3_i32 : i32 to index
    %c0_36 = arith.constant 0 : index
    %c0_37 = arith.constant 0 : index
    %139 = vector.load %arg4[%138, %c0_36, %c0_37] : memref<8x24x128xf32, #tpu.memory_space<vmem>>, vector<1x24x128xf32>
    %140 = vector.shape_cast %139 : vector<1x24x128xf32> to vector<24x128xf32>
    %141 = vector.shape_cast %137 : vector<24x128xf32> to vector<1x24x128xf32>
    tpu.vector_store %arg4[%138, %c0_36, %c0_37], %141 {strides = array<i32>} : memref<8x24x128xf32, #tpu.memory_space<vmem>>, vector<1x24x128xf32>,
    %c4_i32 = arith.constant 4 : i32
    %142 = arith.index_cast %c4_i32 : i32 to index
    %c0_38 = arith.constant 0 : index
    %c0_39 = arith.constant 0 : index
    %143 = vector.load %arg2[%142, %c0_38, %c0_39] : memref<8x24x512xf32, #tpu.memory_space<vmem>>, vector<1x24x512xf32>
    %144 = vector.shape_cast %143 : vector<1x24x512xf32> to vector<24x512xf32>
    %cst_40 = arith.constant dense<0.000000e+00> : vector<24x512xf32>
    %145 = tpu.matmul %137, %3, %cst_40 {dimension_numbers = #tpu.dot_dimension_numbers<[1], [0], [0], [1], [0, 0, 1, 1], [], []>} : vector<24x128xf32>, vector<128x512xf32>, vector<24x512xf32> -> vector<24x512xf32>
    %146 = arith.addf %144, %145 : vector<24x512xf32>
    %147 = vector.extract_strided_slice %146 {offsets = [0, 0], sizes = [24, 128], strides = [1, 1]} : vector<24x512xf32> to vector<24x128xf32>
    %148 = arith.negf %147 : vector<24x128xf32>
    %149 = math.exp %148 : vector<24x128xf32>
    %cst_41 = arith.constant 1.000000e+00 : f32
    %150 = vector.broadcast %cst_41 : f32 to vector<24x128xf32>
    %151 = arith.addf %150, %149 : vector<24x128xf32>
    %152 = arith.divf %150, %151 : vector<24x128xf32>
    %153 = vector.extract_strided_slice %146 {offsets = [0, 128], sizes = [24, 128], strides = [1, 1]} : vector<24x512xf32> to vector<24x128xf32>
    %154 = arith.negf %153 : vector<24x128xf32>
    %155 = math.exp %154 : vector<24x128xf32>
    %cst_42 = arith.constant 1.000000e+00 : f32
    %156 = vector.broadcast %cst_42 : f32 to vector<24x128xf32>
    %157 = arith.addf %156, %155 : vector<24x128xf32>
    %158 = arith.divf %156, %157 : vector<24x128xf32>
    %159 = vector.extract_strided_slice %146 {offsets = [0, 256], sizes = [24, 128], strides = [1, 1]} : vector<24x512xf32> to vector<24x128xf32>
    %160 = math.tanh %159 : vector<24x128xf32>
    %161 = vector.extract_strided_slice %146 {offsets = [0, 384], sizes = [24, 128], strides = [1, 1]} : vector<24x512xf32> to vector<24x128xf32>
    %162 = arith.negf %161 : vector<24x128xf32>
    %163 = math.exp %162 : vector<24x128xf32>
    %cst_43 = arith.constant 1.000000e+00 : f32
    %164 = vector.broadcast %cst_43 : f32 to vector<24x128xf32>
    %165 = arith.addf %164, %163 : vector<24x128xf32>
    %166 = arith.divf %164, %165 : vector<24x128xf32>
    %167 = arith.mulf %158, %135 : vector<24x128xf32>
    %168 = arith.mulf %152, %160 : vector<24x128xf32>
    %169 = arith.addf %167, %168 : vector<24x128xf32>
    %170 = math.tanh %169 : vector<24x128xf32>
    %171 = arith.mulf %166, %170 : vector<24x128xf32>
    %172 = arith.index_cast %c4_i32 : i32 to index
    %c0_44 = arith.constant 0 : index
    %c0_45 = arith.constant 0 : index
    %173 = vector.load %arg4[%172, %c0_44, %c0_45] : memref<8x24x128xf32, #tpu.memory_space<vmem>>, vector<1x24x128xf32>
    %174 = vector.shape_cast %173 : vector<1x24x128xf32> to vector<24x128xf32>
    %175 = vector.shape_cast %171 : vector<24x128xf32> to vector<1x24x128xf32>
    tpu.vector_store %arg4[%172, %c0_44, %c0_45], %175 {strides = array<i32>} : memref<8x24x128xf32, #tpu.memory_space<vmem>>, vector<1x24x128xf32>,
    %c5_i32 = arith.constant 5 : i32
    %176 = arith.index_cast %c5_i32 : i32 to index
    %c0_46 = arith.constant 0 : index
    %c0_47 = arith.constant 0 : index
    %177 = vector.load %arg2[%176, %c0_46, %c0_47] : memref<8x24x512xf32, #tpu.memory_space<vmem>>, vector<1x24x512xf32>
    %178 = vector.shape_cast %177 : vector<1x24x512xf32> to vector<24x512xf32>
    %cst_48 = arith.constant dense<0.000000e+00> : vector<24x512xf32>
    %179 = tpu.matmul %171, %3, %cst_48 {dimension_numbers = #tpu.dot_dimension_numbers<[1], [0], [0], [1], [0, 0, 1, 1], [], []>} : vector<24x128xf32>, vector<128x512xf32>, vector<24x512xf32> -> vector<24x512xf32>
    %180 = arith.addf %178, %179 : vector<24x512xf32>
    %181 = vector.extract_strided_slice %180 {offsets = [0, 0], sizes = [24, 128], strides = [1, 1]} : vector<24x512xf32> to vector<24x128xf32>
    %182 = arith.negf %181 : vector<24x128xf32>
    %183 = math.exp %182 : vector<24x128xf32>
    %cst_49 = arith.constant 1.000000e+00 : f32
    %184 = vector.broadcast %cst_49 : f32 to vector<24x128xf32>
    %185 = arith.addf %184, %183 : vector<24x128xf32>
    %186 = arith.divf %184, %185 : vector<24x128xf32>
    %187 = vector.extract_strided_slice %180 {offsets = [0, 128], sizes = [24, 128], strides = [1, 1]} : vector<24x512xf32> to vector<24x128xf32>
    %188 = arith.negf %187 : vector<24x128xf32>
    %189 = math.exp %188 : vector<24x128xf32>
    %cst_50 = arith.constant 1.000000e+00 : f32
    %190 = vector.broadcast %cst_50 : f32 to vector<24x128xf32>
    %191 = arith.addf %190, %189 : vector<24x128xf32>
    %192 = arith.divf %190, %191 : vector<24x128xf32>
    %193 = vector.extract_strided_slice %180 {offsets = [0, 256], sizes = [24, 128], strides = [1, 1]} : vector<24x512xf32> to vector<24x128xf32>
    %194 = math.tanh %193 : vector<24x128xf32>
    %195 = vector.extract_strided_slice %180 {offsets = [0, 384], sizes = [24, 128], strides = [1, 1]} : vector<24x512xf32> to vector<24x128xf32>
    %196 = arith.negf %195 : vector<24x128xf32>
    %197 = math.exp %196 : vector<24x128xf32>
    %cst_51 = arith.constant 1.000000e+00 : f32
    %198 = vector.broadcast %cst_51 : f32 to vector<24x128xf32>
    %199 = arith.addf %198, %197 : vector<24x128xf32>
    %200 = arith.divf %198, %199 : vector<24x128xf32>
    %201 = arith.mulf %192, %169 : vector<24x128xf32>
    %202 = arith.mulf %186, %194 : vector<24x128xf32>
    %203 = arith.addf %201, %202 : vector<24x128xf32>
    %204 = math.tanh %203 : vector<24x128xf32>
    %205 = arith.mulf %200, %204 : vector<24x128xf32>
    %206 = arith.index_cast %c5_i32 : i32 to index
    %c0_52 = arith.constant 0 : index
    %c0_53 = arith.constant 0 : index
    %207 = vector.load %arg4[%206, %c0_52, %c0_53] : memref<8x24x128xf32, #tpu.memory_space<vmem>>, vector<1x24x128xf32>
    %208 = vector.shape_cast %207 : vector<1x24x128xf32> to vector<24x128xf32>
    %209 = vector.shape_cast %205 : vector<24x128xf32> to vector<1x24x128xf32>
    tpu.vector_store %arg4[%206, %c0_52, %c0_53], %209 {strides = array<i32>} : memref<8x24x128xf32, #tpu.memory_space<vmem>>, vector<1x24x128xf32>,
    %c6_i32 = arith.constant 6 : i32
    %210 = arith.index_cast %c6_i32 : i32 to index
    %c0_54 = arith.constant 0 : index
    %c0_55 = arith.constant 0 : index
    %211 = vector.load %arg2[%210, %c0_54, %c0_55] : memref<8x24x512xf32, #tpu.memory_space<vmem>>, vector<1x24x512xf32>
    %212 = vector.shape_cast %211 : vector<1x24x512xf32> to vector<24x512xf32>
    %cst_56 = arith.constant dense<0.000000e+00> : vector<24x512xf32>
    %213 = tpu.matmul %205, %3, %cst_56 {dimension_numbers = #tpu.dot_dimension_numbers<[1], [0], [0], [1], [0, 0, 1, 1], [], []>} : vector<24x128xf32>, vector<128x512xf32>, vector<24x512xf32> -> vector<24x512xf32>
    %214 = arith.addf %212, %213 : vector<24x512xf32>
    %215 = vector.extract_strided_slice %214 {offsets = [0, 0], sizes = [24, 128], strides = [1, 1]} : vector<24x512xf32> to vector<24x128xf32>
    %216 = arith.negf %215 : vector<24x128xf32>
    %217 = math.exp %216 : vector<24x128xf32>
    %cst_57 = arith.constant 1.000000e+00 : f32
    %218 = vector.broadcast %cst_57 : f32 to vector<24x128xf32>
    %219 = arith.addf %218, %217 : vector<24x128xf32>
    %220 = arith.divf %218, %219 : vector<24x128xf32>
    %221 = vector.extract_strided_slice %214 {offsets = [0, 128], sizes = [24, 128], strides = [1, 1]} : vector<24x512xf32> to vector<24x128xf32>
    %222 = arith.negf %221 : vector<24x128xf32>
    %223 = math.exp %222 : vector<24x128xf32>
    %cst_58 = arith.constant 1.000000e+00 : f32
    %224 = vector.broadcast %cst_58 : f32 to vector<24x128xf32>
    %225 = arith.addf %224, %223 : vector<24x128xf32>
    %226 = arith.divf %224, %225 : vector<24x128xf32>
    %227 = vector.extract_strided_slice %214 {offsets = [0, 256], sizes = [24, 128], strides = [1, 1]} : vector<24x512xf32> to vector<24x128xf32>
    %228 = math.tanh %227 : vector<24x128xf32>
    %229 = vector.extract_strided_slice %214 {offsets = [0, 384], sizes = [24, 128], strides = [1, 1]} : vector<24x512xf32> to vector<24x128xf32>
    %230 = arith.negf %229 : vector<24x128xf32>
    %231 = math.exp %230 : vector<24x128xf32>
    %cst_59 = arith.constant 1.000000e+00 : f32
    %232 = vector.broadcast %cst_59 : f32 to vector<24x128xf32>
    %233 = arith.addf %232, %231 : vector<24x128xf32>
    %234 = arith.divf %232, %233 : vector<24x128xf32>
    %235 = arith.mulf %226, %203 : vector<24x128xf32>
    %236 = arith.mulf %220, %228 : vector<24x128xf32>
    %237 = arith.addf %235, %236 : vector<24x128xf32>
    %238 = math.tanh %237 : vector<24x128xf32>
    %239 = arith.mulf %234, %238 : vector<24x128xf32>
    %240 = arith.index_cast %c6_i32 : i32 to index
    %c0_60 = arith.constant 0 : index
    %c0_61 = arith.constant 0 : index
    %241 = vector.load %arg4[%240, %c0_60, %c0_61] : memref<8x24x128xf32, #tpu.memory_space<vmem>>, vector<1x24x128xf32>
    %242 = vector.shape_cast %241 : vector<1x24x128xf32> to vector<24x128xf32>
    %243 = vector.shape_cast %239 : vector<24x128xf32> to vector<1x24x128xf32>
    tpu.vector_store %arg4[%240, %c0_60, %c0_61], %243 {strides = array<i32>} : memref<8x24x128xf32, #tpu.memory_space<vmem>>, vector<1x24x128xf32>,
    %c7_i32 = arith.constant 7 : i32
    %244 = arith.index_cast %c7_i32 : i32 to index
    %c0_62 = arith.constant 0 : index
    %c0_63 = arith.constant 0 : index
    %245 = vector.load %arg2[%244, %c0_62, %c0_63] : memref<8x24x512xf32, #tpu.memory_space<vmem>>, vector<1x24x512xf32>
    %246 = vector.shape_cast %245 : vector<1x24x512xf32> to vector<24x512xf32>
    %cst_64 = arith.constant dense<0.000000e+00> : vector<24x512xf32>
    %247 = tpu.matmul %239, %3, %cst_64 {dimension_numbers = #tpu.dot_dimension_numbers<[1], [0], [0], [1], [0, 0, 1, 1], [], []>} : vector<24x128xf32>, vector<128x512xf32>, vector<24x512xf32> -> vector<24x512xf32>
    %248 = arith.addf %246, %247 : vector<24x512xf32>
    %249 = vector.extract_strided_slice %248 {offsets = [0, 0], sizes = [24, 128], strides = [1, 1]} : vector<24x512xf32> to vector<24x128xf32>
    %250 = arith.negf %249 : vector<24x128xf32>
    %251 = math.exp %250 : vector<24x128xf32>
    %cst_65 = arith.constant 1.000000e+00 : f32
    %252 = vector.broadcast %cst_65 : f32 to vector<24x128xf32>
    %253 = arith.addf %252, %251 : vector<24x128xf32>
    %254 = arith.divf %252, %253 : vector<24x128xf32>
    %255 = vector.extract_strided_slice %248 {offsets = [0, 128], sizes = [24, 128], strides = [1, 1]} : vector<24x512xf32> to vector<24x128xf32>
    %256 = arith.negf %255 : vector<24x128xf32>
    %257 = math.exp %256 : vector<24x128xf32>
    %cst_66 = arith.constant 1.000000e+00 : f32
    %258 = vector.broadcast %cst_66 : f32 to vector<24x128xf32>
    %259 = arith.addf %258, %257 : vector<24x128xf32>
    %260 = arith.divf %258, %259 : vector<24x128xf32>
    %261 = vector.extract_strided_slice %248 {offsets = [0, 256], sizes = [24, 128], strides = [1, 1]} : vector<24x512xf32> to vector<24x128xf32>
    %262 = math.tanh %261 : vector<24x128xf32>
    %263 = vector.extract_strided_slice %248 {offsets = [0, 384], sizes = [24, 128], strides = [1, 1]} : vector<24x512xf32> to vector<24x128xf32>
    %264 = arith.negf %263 : vector<24x128xf32>
    %265 = math.exp %264 : vector<24x128xf32>
    %cst_67 = arith.constant 1.000000e+00 : f32
    %266 = vector.broadcast %cst_67 : f32 to vector<24x128xf32>
    %267 = arith.addf %266, %265 : vector<24x128xf32>
    %268 = arith.divf %266, %267 : vector<24x128xf32>
    %269 = arith.mulf %260, %237 : vector<24x128xf32>
    %270 = arith.mulf %254, %262 : vector<24x128xf32>
    %271 = arith.addf %269, %270 : vector<24x128xf32>
    %272 = math.tanh %271 : vector<24x128xf32>
    %273 = arith.mulf %268, %272 : vector<24x128xf32>
    %274 = arith.index_cast %c7_i32 : i32 to index
    %c0_68 = arith.constant 0 : index
    %c0_69 = arith.constant 0 : index
    %275 = vector.load %arg4[%274, %c0_68, %c0_69] : memref<8x24x128xf32, #tpu.memory_space<vmem>>, vector<1x24x128xf32>
    %276 = vector.shape_cast %275 : vector<1x24x128xf32> to vector<24x128xf32>
    %277 = vector.shape_cast %273 : vector<24x128xf32> to vector<1x24x128xf32>
    tpu.vector_store %arg4[%274, %c0_68, %c0_69], %277 {strides = array<i32>} : memref<8x24x128xf32, #tpu.memory_space<vmem>>, vector<1x24x128xf32>,
    %c8_i32 = arith.constant 8 : i32
    %c0_70 = arith.constant 0 : index
    %c0_71 = arith.constant 0 : index
    %278 = vector.load %arg5[%c0_70, %c0_71] : memref<24x128xf32, #tpu.memory_space<vmem>>, vector<24x128xf32>
    tpu.vector_store %arg5[%c0_70, %c0_71], %273 {strides = array<i32>} : memref<24x128xf32, #tpu.memory_space<vmem>>, vector<24x128xf32>,
    %c0_72 = arith.constant 0 : index
    %c0_73 = arith.constant 0 : index
    %279 = vector.load %arg6[%c0_72, %c0_73] : memref<24x128xf32, #tpu.memory_space<vmem>>, vector<24x128xf32>
    tpu.vector_store %arg6[%c0_72, %c0_73], %271 {strides = array<i32>} : memref<24x128xf32, #tpu.memory_space<vmem>>, vector<24x128xf32>,
    return
  }
  func.func @transform_0(%arg0: i32, %arg1: i32) -> (i32, i32, i32) {
    %c0_i32 = arith.constant 0 : i32
    %c0_i32_0 = arith.constant 0 : i32
    return %arg1, %arg0, %c0_i32 : i32, i32, i32
  }
  func.func @transform_1(%arg0: i32, %arg1: i32) -> (i32, i32) {
    %c0_i32 = arith.constant 0 : i32
    %c0_i32_0 = arith.constant 0 : i32
    %c0_i32_1 = arith.constant 0 : i32
    return %c0_i32, %c0_i32_0 : i32, i32
  }
  func.func @transform_2(%arg0: i32, %arg1: i32) -> (i32, i32, i32) {
    %c0_i32 = arith.constant 0 : i32
    %c0_i32_0 = arith.constant 0 : i32
    return %arg1, %arg0, %c0_i32 : i32, i32, i32
  }
}

</mosaic_0001>

<llo_original>
// kernel: cpu_lstm_model_pallas.1
$region0: #{cpu_lstm_model_pallas.1}
  #allocation0 [shape = 'u32[]', space=smem, size = 0x4, offset = 0x4, fixed_abs, tag = 'smem constant byte address 0x4 - core index']
  #allocation1 [shape = 'u32[144,128]{1,0:T(1,128)}', space=vmem, size = 0x12000, scoped, tag = 'internal scratch']
  #allocation2 [shape = 'f32[24,128]{1,0:T(8,128)}', space=vmem, size = 0x3000, scoped, tag = 'scratch operand']
  #allocation3 [shape = 'f32[24,128]{1,0:T(8,128)}', space=vmem, size = 0x3000, scoped, tag = 'scratch operand']
  %s0 = inlined_call_operand.vmem [shape: f32[16,24,512], index: 0, kind: input, shape index: {}]
  %s1 = inlined_call_operand.vmem [shape: f32[128,512], index: 1, kind: input, shape index: {}]
  %s2 = inlined_call_operand.vmem [shape: f32[16,24,128], index: 2, kind: output, shape index: {}]
  %s3 = sld [smem:[#allocation0]]
  $region45: #{cpu_lstm_model_pallas.1} parent=0
    _
  %s5 = ssub.s32 1, %s3
  %s6 = scalar_select 0, %s5, %s3
  loop: start=0, step=1, limit=4
  $region2: #{cpu_lstm_model_pallas.1} parent=0 // loop_pre_header
    _
  $region3: #{cpu_lstm_model_pallas.1} parent=0 // loop_header
    %s8 = sphi 0, %s12
    %p9 = scmp.ge.s32.totalorder %s8, 4
    %s15 = sphi 0, %s27
    %s16 = sphi 0, %s23
    %s17 = sphi 0, %s15
    %s18 = sphi 0, %s16
    %s19 = sphi 0, %s17
    %s20 = sphi 0, %s18
    %s32 = sphi 0, %s34
    %s35 = sphi 0, %s32
    %s36 = sphi 0, %s35
    %s52 = sphi 0, %s36
    %s56 = sphi 0, %s56
    %s58 = sphi 0, %s56
    %s59 = sphi 0, %s58
    %s73 = sphi 0, %s59
    %s81 = sphi 0, %s83
    %s84 = sphi 0, %s81
    %s85 = sphi 0, %s84
    %s101 = sphi 0, %s85
  $region4: #{cpu_lstm_model_pallas.1} parent=0 // loop_header_branch
    %11 = sbr.rel (%p9) target = $region8
  $region5: #{cpu_lstm_model_pallas.1} parent=0 // loop_body
    %s13 = ssub.s32 %s8, 1
    %s14 = ssub.s32 %s8, 2
    %s21 = sadd.s32 1, %s16
    %p22 = scmp.ge.s32.totalorder %s21, 2
    %s23 = scalar_select %p22, 0, %s21
    %s24 = sadd.s32 1, %s15
    %s25 = scalar_select %p22, %s24, %s15
    %p26 = scmp.ge.s32.totalorder %s25, 1
    %s27 = scalar_select %p26, 0, %s25
    %s28 = ssub.s32 %s16, %s23
    %s29 = ssub.s32 %s15, %s27
    %s30 = sor.u32 %s28, %s29
    %p31 = scmp.eq.s32.totalorder %s30, 0
    %s33 = sadd.s32 %s32, 1
    %s34 = scalar_select %p31, %s32, %s33
    %p37 = pneg %p31
    %p38 = scmp.eq.s32.totalorder %s8, 1
    %p39 = por %p37, %p38
    %p40 = scmp.ne.s32.totalorder %s32, %s35
    %p41 = scmp.eq.s32.totalorder %s8, 0
    %p42 = por %p40, %p41
    %p43 = scmp.ne.s32.totalorder %s32, %s35
    %p44 = scmp.eq.s32.totalorder %s13, 1
    %p45 = por %p43, %p44
    %p46 = scmp.ne.s32.totalorder %s35, %s36
    %p47 = scmp.eq.s32.totalorder %s13, 0
    %p48 = por %p46, %p47
    %p49 = scmp.ne.s32.totalorder %s35, %s36
    %p50 = scmp.eq.s32.totalorder %s14, 1
    %p51 = por %p49, %p50
    %p53 = scmp.ne.s32.totalorder %s36, %s52
    %p54 = scmp.eq.s32.totalorder %s14, 0
    %p55 = por %p53, %p54
    %s57 = sadd.s32 %s56, 1
    %p60 = scmp.eq.s32.totalorder %s8, 1
    %p61 = scmp.ne.s32.totalorder %s56, %s58
    %p62 = scmp.eq.s32.totalorder %s8, 0
    %p63 = por %p61, %p62
    %p64 = scmp.ne.s32.totalorder %s56, %s58
    %p65 = scmp.eq.s32.totalorder %s13, 1
    %p66 = por %p64, %p65
    %p67 = scmp.ne.s32.totalorder %s58, %s59
    %p68 = scmp.eq.s32.totalorder %s13, 0
    %p69 = por %p67, %p68
    %p70 = scmp.ne.s32.totalorder %s58, %s59
    %p71 = scmp.eq.s32.totalorder %s14, 1
    %p72 = por %p70, %p71
    %p74 = scmp.ne.s32.totalorder %s59, %s73
    %p75 = scmp.eq.s32.totalorder %s14, 0
    %p76 = por %p74, %p75
    %s77 = ssub.s32 %s16, %s23
    %s78 = ssub.s32 %s15, %s27
    %s79 = sor.u32 %s77, %s78
    %p80 = scmp.eq.s32.totalorder %s79, 0
    %s82 = sadd.s32 %s81, 1
    %s83 = scalar_select %p80, %s81, %s82
    %p86 = pneg %p80
    %p87 = scmp.eq.s32.totalorder %s8, 1
    %p88 = por %p86, %p87
    %p89 = scmp.ne.s32.totalorder %s81, %s84
    %p90 = scmp.eq.s32.totalorder %s8, 0
    %p91 = por %p89, %p90
    %p92 = scmp.ne.s32.totalorder %s81, %s84
    %p93 = scmp.eq.s32.totalorder %s13, 1
    %p94 = por %p92, %p93
    %p95 = scmp.ne.s32.totalorder %s84, %s85
    %p96 = scmp.eq.s32.totalorder %s13, 0
    %p97 = por %p95, %p96
    %p98 = scmp.ne.s32.totalorder %s84, %s85
    %p99 = scmp.eq.s32.totalorder %s14, 1
    %p100 = por %p98, %p99
    %p102 = scmp.ne.s32.totalorder %s85, %s101
    %p103 = scmp.eq.s32.totalorder %s14, 0
    %p104 = por %p102, %p103
    %p105 = scmp.le.s32.totalorder 1, %s8
    %p106 = scmp.lt.s32.totalorder %s8, 3
    %p107 = pnand %p105, %p106
    %p108 = pneg %p107
    // Predicated region
    $region9: #{cpu_lstm_model_pallas.1} parent=5 // pred_check
      _
    $region10: #{cpu_lstm_model_pallas.1} parent=5 // pred_check_branch
      %110 = sbr.rel (%p107) target = $region12
    $region11: #{cpu_lstm_model_pallas.1} parent=5 // pred_region
      %s111 = ssub.s32 %s8, 1
      // Predicated region
      $region13: #{cpu_lstm_model_pallas.1} parent=11 // pred_check
        %p112 = pneg %p69
      $region14: #{cpu_lstm_model_pallas.1} parent=11 // pred_check_branch
        %114 = sbr.rel (%p112) target = $region16
      $region15: #{cpu_lstm_model_pallas.1} parent=11 // pred_region
        _
      $region16: #{cpu_lstm_model_pallas.1} parent=11 // pred_fallthru
        _
    $region12: #{cpu_lstm_model_pallas.1} parent=5 // pred_fallthru
      _
    %p115 = scmp.lt.s32.totalorder %s8, 2
    // Predicated region
    $region17: #{cpu_lstm_model_pallas.1} parent=5 // pred_check
      %p116 = pneg %p115
    $region18: #{cpu_lstm_model_pallas.1} parent=5 // pred_check_branch
      %118 = sbr.rel (%p116) target = $region20
    $region19: #{cpu_lstm_model_pallas.1} parent=5 // pred_region
      // Predicated region
      $region21: #{cpu_lstm_model_pallas.1} parent=19 // pred_check
        %p119 = pneg %p42
      $region22: #{cpu_lstm_model_pallas.1} parent=19 // pred_check_branch
        %121 = sbr.rel (%p119) target = $region24
      $region23: #{cpu_lstm_model_pallas.1} parent=19 // pred_region
        %s122 = smul.u32 8, %s16
        %s123 = smul.u32 3, %s15
        %p124 = scmp.lt.s32.totalorder %s122, 15
        %s125 = scalar_select %p124, %s122, 15
        %p126 = scmp.lt.s32.totalorder %s123, 2
        %s127 = scalar_select %p126, %s123, 2
        %s128 = smul.addr %s127, 4
        %s129 = smul.addr %s125, 12
        %s130 = sadd.s32 %s128, %s129
        %s131 = smul.addr %s130, 8
        %s132 = scalar_lea.vmem %s0, %s131
        %s133 = smul.u32 8, %s16
        %s134 = smul.u32 3, %s15
      $region24: #{cpu_lstm_model_pallas.1} parent=19 // pred_fallthru
        _
    $region20: #{cpu_lstm_model_pallas.1} parent=5 // pred_fallthru
      _
    %p135 = scmp.le.s32.totalorder 1, %s8
    %p136 = scmp.lt.s32.totalorder %s8, 3
    %p137 = pnand %p135, %p136
    %p138 = pneg %p137
    // Predicated region
    $region25: #{cpu_lstm_model_pallas.1} parent=5 // pred_check
      _
    $region26: #{cpu_lstm_model_pallas.1} parent=5 // pred_check_branch
      %140 = sbr.rel (%p137) target = $region28
    $region27: #{cpu_lstm_model_pallas.1} parent=5 // pred_region
      %s141 = ssub.s32 %s8, 1
      %s142 = smul.u32 8, %s18
      %s143 = smul.u32 3, %s17
      %p144 = scmp.lt.s32.totalorder %s142, 15
      %s145 = scalar_select %p144, %s142, 15
      %p146 = scmp.lt.s32.totalorder %s143, 2
      %s147 = scalar_select %p146, %s143, 2
      %s148 = smul.addr %s147, 4
      %s149 = smul.addr %s145, 12
      %s150 = sadd.s32 %s148, %s149
      %s151 = smul.addr %s150, 8
      %s152 = scalar_lea.vmem %s0, %s151
      %p153 = pneg %p48
      %p154 = pneg %p45
      %p155 = pneg %p69
      %p156 = pneg %p66
      %p157 = pneg %p97
      %p158 = pneg %p94
      %s159 = smul.u32 8, %s18
      %s160 = smul.u32 3, %s17
      %p161 = scmp.lt.s32.totalorder %s159, 15
      %s162 = scalar_select %p161, %s159, 15
      %p163 = scmp.lt.s32.totalorder %s160, 2
      %s164 = scalar_select %p163, %s160, 2
      %s165 = smul.addr %s162, 3
      %s166 = sadd.s32 %s164, %s165
      %s167 = smul.addr %s166, 8
      %s168 = scalar_lea.vmem %s2, %s167
      %s169 = smul.u32 8, %s18
      %s170 = smul.u32 3, %s17
      %p171 = scmp.lt.s32.totalorder %s169, 15
      %s172 = scalar_select %p171, %s169, 15
      %p173 = scmp.lt.s32.totalorder %s170, 2
      %s174 = scalar_select %p173, %s170, 2
      %s175 = smul.addr %s174, 4
      %s176 = smul.addr %s172, 12
      %s177 = sadd.s32 %s175, %s176
      %s178 = smul.addr %s177, 8
      %s179 = scalar_lea.vmem %s0, %s178
      %s180 = smul.u32 8, %s18
      %s181 = smul.u32 3, %s17
      %s182 = smul.u32 8, %s18
      %s183 = smul.u32 3, %s17
      %p184 = scmp.lt.s32.totalorder %s182, 15
      %s185 = scalar_select %p184, %s182, 15
      %p186 = scmp.lt.s32.totalorder %s183, 2
      %s187 = scalar_select %p186, %s183, 2
      %s188 = smul.addr %s185, 3
      %s189 = sadd.s32 %s187, %s188
      %s190 = smul.addr %s189, 8
      %s191 = scalar_lea.vmem %s2, %s190
      %s192 = smul.u32 8, %s18
      %s193 = smul.u32 3, %s17
      %p194 = scmp.eq.s32.totalorder %s18, 0
      // Predicated region
      $region29: #{cpu_lstm_model_pallas.1} parent=27 // pred_check
        %p195 = pneg %p194
      $region30: #{cpu_lstm_model_pallas.1} parent=27 // pred_check_branch
        %197 = sbr.rel (%p195) target = $region32
      $region31: #{cpu_lstm_model_pallas.1} parent=27 // pred_region
        %198 = vst [vmem:[#allocation2] sm:$0xff] 0.0
        %199 = vst [vmem:[#allocation2 + $0x8] sm:$0xff] 0.0
        %200 = vst [vmem:[#allocation2 + $0x10] sm:$0xff] 0.0
        %201 = vst [vmem:[#allocation3] sm:$0xff] 0.0
        %202 = vst [vmem:[#allocation3 + $0x8] sm:$0xff] 0.0
        %203 = vst [vmem:[#allocation3 + $0x10] sm:$0xff] 0.0
      $region32: #{cpu_lstm_model_pallas.1} parent=27 // pred_fallthru
        _
      %v204 = vld [vmem:[%s1] sm:$0xff]
      %v205 = vld [vmem:[%s1 + $0x8] sm:$0xff]
      %v206 = vld [vmem:[%s1 + $0x10] sm:$0xff]
      %v207 = vld [vmem:[%s1 + $0x18] sm:$0xff]
      %v208 = vld [vmem:[%s1 + $0x20] sm:$0xff]
      %v209 = vld [vmem:[%s1 + $0x28] sm:$0xff]
      %v210 = vld [vmem:[%s1 + $0x30] sm:$0xff]
      %v211 = vld [vmem:[%s1 + $0x38] sm:$0xff]
      %v212 = vld [vmem:[%s1 + $0x40] sm:$0xff]
      %v213 = vld [vmem:[%s1 + $0x48] sm:$0xff]
      %v214 = vld [vmem:[%s1 + $0x50] sm:$0xff]
      %v215 = vld [vmem:[%s1 + $0x58] sm:$0xff]
      %v216 = vld [vmem:[%s1 + $0x60] sm:$0xff]
      %v217 = vld [vmem:[%s1 + $0x68] sm:$0xff]
      %v218 = vld [vmem:[%s1 + $0x70] sm:$0xff]
      %v219 = vld [vmem:[%s1 + $0x78] sm:$0xff]
      %v220 = vld [vmem:[%s1 + $0x80] sm:$0xff]
      %v221 = vld [vmem:[%s1 + $0x88] sm:$0xff]
      %v222 = vld [vmem:[%s1 + $0x90] sm:$0xff]
      %v223 = vld [vmem:[%s1 + $0x98] sm:$0xff]
      %v224 = vld [vmem:[%s1 + $0xa0] sm:$0xff]
      %v225 = vld [vmem:[%s1 + $0xa8] sm:$0xff]
      %v226 = vld [vmem:[%s1 + $0xb0] sm:$0xff]
      %v227 = vld [vmem:[%s1 + $0xb8] sm:$0xff]
      %v228 = vld [vmem:[%s1 + $0xc0] sm:$0xff]
      %v229 = vld [vmem:[%s1 + $0xc8] sm:$0xff]
      %v230 = vld [vmem:[%s1 + $0xd0] sm:$0xff]
      %v231 = vld [vmem:[%s1 + $0xd8] sm:$0xff]
      %v232 = vld [vmem:[%s1 + $0xe0] sm:$0xff]
      %v233 = vld [vmem:[%s1 + $0xe8] sm:$0xff]
      %v234 = vld [vmem:[%s1 + $0xf0] sm:$0xff]
      %v235 = vld [vmem:[%s1 + $0xf8] sm:$0xff]
      %v236 = vld [vmem:[%s1 + $0x100] sm:$0xff]
      %v237 = vld [vmem:[%s1 + $0x108] sm:$0xff]
      %v238 = vld [vmem:[%s1 + $0x110] sm:$0xff]
      %v239 = vld [vmem:[%s1 + $0x118] sm:$0xff]
      %v240 = vld [vmem:[%s1 + $0x120] sm:$0xff]
      %v241 = vld [vmem:[%s1 + $0x128] sm:$0xff]
      %v242 = vld [vmem:[%s1 + $0x130] sm:$0xff]
      %v243 = vld [vmem:[%s1 + $0x138] sm:$0xff]
      %v244 = vld [vmem:[%s1 + $0x140] sm:$0xff]
      %v245 = vld [vmem:[%s1 + $0x148] sm:$0xff]
      %v246 = vld [vmem:[%s1 + $0x150] sm:$0xff]
      %v247 = vld [vmem:[%s1 + $0x158] sm:$0xff]
      %v248 = vld [vmem:[%s1 + $0x160] sm:$0xff]
      %v249 = vld [vmem:[%s1 + $0x168] sm:$0xff]
      %v250 = vld [vmem:[%s1 + $0x170] sm:$0xff]
      %v251 = vld [vmem:[%s1 + $0x178] sm:$0xff]
      %v252 = vld [vmem:[%s1 + $0x180] sm:$0xff]
      %v253 = vld [vmem:[%s1 + $0x188] sm:$0xff]
      %v254 = vld [vmem:[%s1 + $0x190] sm:$0xff]
      %v255 = vld [vmem:[%s1 + $0x198] sm:$0xff]
      %v256 = vld [vmem:[%s1 + $0x1a0] sm:$0xff]
      %v257 = vld [vmem:[%s1 + $0x1a8] sm:$0xff]
      %v258 = vld [vmem:[%s1 + $0x1b0] sm:$0xff]
      %v259 = vld [vmem:[%s1 + $0x1b8] sm:$0xff]
      %v260 = vld [vmem:[%s1 + $0x1c0] sm:$0xff]
      %v261 = vld [vmem:[%s1 + $0x1c8] sm:$0xff]
      %v262 = vld [vmem:[%s1 + $0x1d0] sm:$0xff]
      %v263 = vld [vmem:[%s1 + $0x1d8] sm:$0xff]
      %v264 = vld [vmem:[%s1 + $0x1e0] sm:$0xff]
      %v265 = vld [vmem:[%s1 + $0x1e8] sm:$0xff]
      %v266 = vld [vmem:[%s1 + $0x1f0] sm:$0xff]
      %v267 = vld [vmem:[%s1 + $0x1f8] sm:$0xff]
      %v268 = vld [vmem:[#allocation2] sm:$0xff]
      %v269 = vld [vmem:[#allocation2 + $0x8] sm:$0xff]
      %v270 = vld [vmem:[#allocation2 + $0x10] sm:$0xff]
      %v271 = vld [vmem:[#allocation3] sm:$0xff]
      %v272 = vld [vmem:[#allocation3 + $0x8] sm:$0xff]
      %v273 = vld [vmem:[#allocation3 + $0x10] sm:$0xff]
      %v274 = vld [vmem:[%s179] sm:$0xff]
      %v275 = vld [vmem:[%s179 + $0x8] sm:$0xff]
      %v276 = vld [vmem:[%s179 + $0x10] sm:$0xff]
      %v277 = vld [vmem:[%s179 + $0x18] sm:$0xff]
      %v278 = vld [vmem:[%s179 + $0x20] sm:$0xff]
      %v279 = vld [vmem:[%s179 + $0x28] sm:$0xff]
      %v280 = vld [vmem:[%s179 + $0x30] sm:$0xff]
      %v281 = vld [vmem:[%s179 + $0x38] sm:$0xff]
      %v282 = vld [vmem:[%s179 + $0x40] sm:$0xff]
      %v283 = vld [vmem:[%s179 + $0x48] sm:$0xff]
      %v284 = vld [vmem:[%s179 + $0x50] sm:$0xff]
      %v285 = vld [vmem:[%s179 + $0x58] sm:$0xff]
      %286 = vmatprep.subr.mxu0 %v205
      %287 = vmatpush1.msra.mxu0 %v204
      %288 = vmatprep.subr.mxu0 %v209
      %289 = vmatpush1.msra.mxu0 %v208
      %290 = vmatprep.subr.mxu0 %v213
      %291 = vmatpush1.msra.mxu0 %v212
      %292 = vmatprep.subr.mxu0 %v217
      %293 = vmatpush1.msra.mxu0 %v216
      %294 = vmatprep.subr.mxu0 %v221
      %295 = vmatpush1.msra.mxu0 %v220
      %296 = vmatprep.subr.mxu0 %v225
      %297 = vmatpush1.msra.mxu0 %v224
      %298 = vmatprep.subr.mxu0 %v229
      %299 = vmatpush1.msra.mxu0 %v228
      %300 = vmatprep.subr.mxu0 %v233
      %301 = vmatpush1.msra.mxu0 %v232
      %302 = vmatprep.subr.mxu0 %v237
      %303 = vmatpush1.msra.mxu0 %v236
      %304 = vmatprep.subr.mxu0 %v241
      %305 = vmatpush1.msra.mxu0 %v240
      %306 = vmatprep.subr.mxu0 %v245
      %307 = vmatpush1.msra.mxu0 %v244
      %308 = vmatprep.subr.mxu0 %v249
      %309 = vmatpush1.msra.mxu0 %v248
      %310 = vmatprep.subr.mxu0 %v253
      %311 = vmatpush1.msra.mxu0 %v252
      %312 = vmatprep.subr.mxu0 %v257
      %313 = vmatpush1.msra.mxu0 %v256
      %314 = vmatprep.subr.mxu0 %v261
      %315 = vmatpush1.msra.mxu0 %v260
      %316 = vmatprep.subr.mxu0 %v265
      %317 = vmatpush1.msra.mxu0 %v264
      %318 = vmatprep.subr.mxu0 0.0
      %319 = vmatpush1.msra.mxu0 0.0
      %320 = vmatprep.subr.mxu0 0.0
      %321 = vmatpush1.msra.mxu0 0.0
      %322 = vmatprep.subr.mxu0 0.0
      %323 = vmatpush1.msra.mxu0 0.0
      %324 = vmatprep.subr.mxu0 0.0
      %325 = vmatpush1.msra.mxu0 0.0
      %326 = vmatprep.subr.mxu0 0.0
      %327 = vmatpush1.msra.mxu0 0.0
      %328 = vmatprep.subr.mxu0 0.0
      %329 = vmatpush1.msra.mxu0 0.0
      %330 = vmatprep.subr.mxu0 0.0
      %331 = vmatpush1.msra.mxu0 0.0
      %332 = vmatprep.subr.mxu0 0.0
      %333 = vmatpush1.msra.mxu0 0.0
      %334 = vmatprep.subr.mxu0 0.0
      %335 = vmatpush1.msra.mxu0 0.0
      %336 = vmatprep.subr.mxu0 0.0
      %337 = vmatpush1.msra.mxu0 0.0
      %338 = vmatprep.subr.mxu0 0.0
      %339 = vmatpush1.msra.mxu0 0.0
      %340 = vmatprep.subr.mxu0 0.0
      %341 = vmatpush1.msra.mxu0 0.0
      %342 = vmatprep.subr.mxu0 0.0
      %343 = vmatpush1.msra.mxu0 0.0
      %344 = vmatprep.subr.mxu0 0.0
      %345 = vmatpush1.msra.mxu0 0.0
      %346 = vmatprep.subr.mxu0 0.0
      %347 = vmatpush1.msra.mxu0 0.0
      %348 = vmatprep.subr.mxu0 0.0
      %349 = vmatpush1.msra.mxu0 0.0
      %350 = vmatprep.mubr.f32.mxu0 0.0
      %351 = vmatmul.mubr.f32.gmra.mrb[0].mxu0 %v268
      %v352 = vpop.f32.mrb[0].mxu0
      %v353 = vadd.f32 0.0, %v352
      %v354 = vpop.f32.mrb[0].mxu0
      %v355 = vadd.f32 0.0, %v354
      %356 = vmatprep.mubr.f32.mxu0 0.0
      %357 = vmatmul.mubr.f32.gmra.mrb[0].mxu0 %v269
      %v358 = vpop.f32.mrb[0].mxu0
      %v359 = vadd.f32 0.0, %v358
      %v360 = vpop.f32.mrb[0].mxu0
      %v361 = vadd.f32 0.0, %v360
      %362 = vmatprep.mubr.f32.mxu0 0.0
      %363 = vmatmul.mubr.f32.gmra.mrb[0].mxu0 %v270
      %v364 = vpop.f32.mrb[0].mxu0
      %v365 = vadd.f32 0.0, %v364
      %v366 = vpop.f32.mrb[0].mxu0
      %v367 = vadd.f32 0.0, %v366
      %368 = vdwg.mxu0
      %369 = vmatprep.subr.mxu0 %v207
      %370 = vmatpush1.msra.mxu0 %v206
      %371 = vmatprep.subr.mxu0 %v211
      %372 = vmatpush1.msra.mxu0 %v210
      %373 = vmatprep.subr.mxu0 %v215
      %374 = vmatpush1.msra.mxu0 %v214
      %375 = vmatprep.subr.mxu0 %v219
      %376 = vmatpush1.msra.mxu0 %v218
      %377 = vmatprep.subr.mxu0 %v223
      %378 = vmatpush1.msra.mxu0 %v222
      %379 = vmatprep.subr.mxu0 %v227
      %380 = vmatpush1.msra.mxu0 %v226
      %381 = vmatprep.subr.mxu0 %v231
      %382 = vmatpush1.msra.mxu0 %v230
      %383 = vmatprep.subr.mxu0 %v235
      %384 = vmatpush1.msra.mxu0 %v234
      %385 = vmatprep.subr.mxu0 %v239
      %386 = vmatpush1.msra.mxu0 %v238
      %387 = vmatprep.subr.mxu0 %v243
      %388 = vmatpush1.msra.mxu0 %v242
      %389 = vmatprep.subr.mxu0 %v247
      %390 = vmatpush1.msra.mxu0 %v246
      %391 = vmatprep.subr.mxu0 %v251
      %392 = vmatpush1.msra.mxu0 %v250
      %393 = vmatprep.subr.mxu0 %v255
      %394 = vmatpush1.msra.mxu0 %v254
      %395 = vmatprep.subr.mxu0 %v259
      %396 = vmatpush1.msra.mxu0 %v258
      %397 = vmatprep.subr.mxu0 %v263
      %398 = vmatpush1.msra.mxu0 %v262
      %399 = vmatprep.subr.mxu0 %v267
      %400 = vmatpush1.msra.mxu0 %v266
      %401 = vmatprep.subr.mxu0 0.0
      %402 = vmatpush1.msra.mxu0 0.0
      %403 = vmatprep.subr.mxu0 0.0
      %404 = vmatpush1.msra.mxu0 0.0
      %405 = vmatprep.subr.mxu0 0.0
      %406 = vmatpush1.msra.mxu0 0.0
      %407 = vmatprep.subr.mxu0 0.0
      %408 = vmatpush1.msra.mxu0 0.0
      %409 = vmatprep.subr.mxu0 0.0
      %410 = vmatpush1.msra.mxu0 0.0
      %411 = vmatprep.subr.mxu0 0.0
      %412 = vmatpush1.msra.mxu0 0.0
      %413 = vmatprep.subr.mxu0 0.0
      %414 = vmatpush1.msra.mxu0 0.0
      %415 = vmatprep.subr.mxu0 0.0
      %416 = vmatpush1.msra.mxu0 0.0
      %417 = vmatprep.subr.mxu0 0.0
      %418 = vmatpush1.msra.mxu0 0.0
      %419 = vmatprep.subr.mxu0 0.0
      %420 = vmatpush1.msra.mxu0 0.0
      %421 = vmatprep.subr.mxu0 0.0
      %422 = vmatpush1.msra.mxu0 0.0
      %423 = vmatprep.subr.mxu0 0.0
      %424 = vmatpush1.msra.mxu0 0.0
      %425 = vmatprep.subr.mxu0 0.0
      %426 = vmatpush1.msra.mxu0 0.0
      %427 = vmatprep.subr.mxu0 0.0
      %428 = vmatpush1.msra.mxu0 0.0
      %429 = vmatprep.subr.mxu0 0.0
      %430 = vmatpush1.msra.mxu0 0.0
      %431 = vmatprep.subr.mxu0 0.0
      %432 = vmatpush1.msra.mxu0 0.0
      %433 = vmatprep.mubr.f32.mxu0 0.0
      %434 = vmatmul.mubr.f32.gmra.mrb[0].mxu0 %v268
      %v435 = vpop.f32.mrb[0].mxu0
      %v436 = vadd.f32 0.0, %v435
      %v437 = vpop.f32.mrb[0].mxu0
      %v438 = vadd.f32 0.0, %v437
      %439 = vmatprep.mubr.f32.mxu0 0.0
      %440 = vmatmul.mubr.f32.gmra.mrb[0].mxu0 %v269
      %v441 = vpop.f32.mrb[0].mxu0
      %v442 = vadd.f32 0.0, %v441
      %v443 = vpop.f32.mrb[0].mxu0
      %v444 = vadd.f32 0.0, %v443
      %445 = vmatprep.mubr.f32.mxu0 0.0
      %446 = vmatmul.mubr.f32.gmra.mrb[0].mxu0 %v270
      %v447 = vpop.f32.mrb[0].mxu0
      %v448 = vadd.f32 0.0, %v447
      %v449 = vpop.f32.mrb[0].mxu0
      %v450 = vadd.f32 0.0, %v449
      %451 = vdwg.mxu0
      %v452 = vadd.f32 %v274, %v353
      %v453 = vadd.f32 %v275, %v355
      %v454 = vadd.f32 %v276, %v436
      %v455 = vadd.f32 %v277, %v438
      %v456 = vadd.f32 %v278, %v359
      %v457 = vadd.f32 %v279, %v361
      %v458 = vadd.f32 %v280, %v442
      %v459 = vadd.f32 %v281, %v444
      %v460 = vadd.f32 %v282, %v365
      %v461 = vadd.f32 %v283, %v367
      %v462 = vadd.f32 %v284, %v448
      %v463 = vadd.f32 %v285, %v450
      %v464 = vxor.u32 %v452, 2147483648
      %v465 = vxor.u32 %v456, 2147483648
      %v466 = vxor.u32 %v460, 2147483648
      %v467 = vmul.f32 %v464, 1.442695
      %v468 = vpow.pop %v467
      %v469 = vmul.f32 %v465, 1.442695
      %v470 = vpow.pop %v469
      %v471 = vmul.f32 %v466, 1.442695
      %v472 = vpow.pop %v471
      %v473 = vadd.f32 %v468, 1.0
      %v474 = vadd.f32 %v470, 1.0
      %v475 = vadd.f32 %v472, 1.0
      %v476 = vrcp.pop %v473
      %v477 = vmul.f32 1.0, %v476
      %v478 = vrcp.pop %v474
      %v479 = vmul.f32 1.0, %v478
      %v480 = vrcp.pop %v475
      %v481 = vmul.f32 1.0, %v480
      %v482 = vxor.u32 %v453, 2147483648
      %v483 = vxor.u32 %v457, 2147483648
      %v484 = vxor.u32 %v461, 2147483648
      %v485 = vmul.f32 %v482, 1.442695
      %v486 = vpow.pop %v485
      %v487 = vmul.f32 %v483, 1.442695
      %v488 = vpow.pop %v487
      %v489 = vmul.f32 %v484, 1.442695
      %v490 = vpow.pop %v489
      %v491 = vadd.f32 %v486, 1.0
      %v492 = vadd.f32 %v488, 1.0
      %v493 = vadd.f32 %v490, 1.0
      %v494 = vrcp.pop %v491
      %v495 = vmul.f32 1.0, %v494
      %v496 = vrcp.pop %v492
      %v497 = vmul.f32 1.0, %v496
      %v498 = vrcp.pop %v493
      %v499 = vmul.f32 1.0, %v498
      %v500 = vtanh.pop %v454
      %v501 = vtanh.pop %v458
      %v502 = vtanh.pop %v462
      %v503 = vxor.u32 %v455, 2147483648
      %v504 = vxor.u32 %v459, 2147483648
      %v505 = vxor.u32 %v463, 2147483648
      %v506 = vmul.f32 %v503, 1.442695
      %v507 = vpow.pop %v506
      %v508 = vmul.f32 %v504, 1.442695
      %v509 = vpow.pop %v508
      %v510 = vmul.f32 %v505, 1.442695
      %v511 = vpow.pop %v510
      %v512 = vadd.f32 %v507, 1.0
      %v513 = vadd.f32 %v509, 1.0
      %v514 = vadd.f32 %v511, 1.0
      %v515 = vrcp.pop %v512
      %v516 = vmul.f32 1.0, %v515
      %v517 = vrcp.pop %v513
      %v518 = vmul.f32 1.0, %v517
      %v519 = vrcp.pop %v514
      %v520 = vmul.f32 1.0, %v519
      %v521 = vmul.f32 %v495, %v271
      %v522 = vmul.f32 %v497, %v272
      %v523 = vmul.f32 %v499, %v273
      %v524 = vmul.f32 %v477, %v500
      %v525 = vmul.f32 %v479, %v501
      %v526 = vmul.f32 %v481, %v502
      %v527 = vadd.f32 %v521, %v524
      %v528 = vadd.f32 %v522, %v525
      %v529 = vadd.f32 %v523, %v526
      %v530 = vtanh.pop %v527
      %v531 = vtanh.pop %v528
      %v532 = vtanh.pop %v529
      %v533 = vmul.f32 %v516, %v530
      %v534 = vmul.f32 %v518, %v531
      %v535 = vmul.f32 %v520, %v532
      %536 = vst [vmem:[%s191] sm:$0xff] %v533
      %537 = vst [vmem:[%s191 + $0x8] sm:$0xff] %v534
      %538 = vst [vmem:[%s191 + $0x10] sm:$0xff] %v535
      %s539 = scalar_lea.vmem %s179, 96
      %v540 = vld [vmem:[%s539] sm:$0xff]
      %v541 = vld [vmem:[%s539 + $0x8] sm:$0xff]
      %v542 = vld [vmem:[%s539 + $0x10] sm:$0xff]
      %v543 = vld [vmem:[%s539 + $0x18] sm:$0xff]
      %v544 = vld [vmem:[%s539 + $0x20] sm:$0xff]
      %v545 = vld [vmem:[%s539 + $0x28] sm:$0xff]
      %v546 = vld [vmem:[%s539 + $0x30] sm:$0xff]
      %v547 = vld [vmem:[%s539 + $0x38] sm:$0xff]
      %v548 = vld [vmem:[%s539 + $0x40] sm:$0xff]
      %v549 = vld [vmem:[%s539 + $0x48] sm:$0xff]
      %v550 = vld [vmem:[%s539 + $0x50] sm:$0xff]
      %v551 = vld [vmem:[%s539 + $0x58] sm:$0xff]
      %552 = vmatprep.subr.mxu0 %v205
      %553 = vmatpush1.msra.mxu0 %v204
      %554 = vmatprep.subr.mxu0 %v209
      %555 = vmatpush1.msra.mxu0 %v208
      %556 = vmatprep.subr.mxu0 %v213
      %557 = vmatpush1.msra.mxu0 %v212
      %558 = vmatprep.subr.mxu0 %v217
      %559 = vmatpush1.msra.mxu0 %v216
      %560 = vmatprep.subr.mxu0 %v221
      %561 = vmatpush1.msra.mxu0 %v220
      %562 = vmatprep.subr.mxu0 %v225
      %563 = vmatpush1.msra.mxu0 %v224
      %564 = vmatprep.subr.mxu0 %v229
      %565 = vmatpush1.msra.mxu0 %v228
      %566 = vmatprep.subr.mxu0 %v233
      %567 = vmatpush1.msra.mxu0 %v232
      %568 = vmatprep.subr.mxu0 %v237
      %569 = vmatpush1.msra.mxu0 %v236
      %570 = vmatprep.subr.mxu0 %v241
      %571 = vmatpush1.msra.mxu0 %v240
      %572 = vmatprep.subr.mxu0 %v245
      %573 = vmatpush1.msra.mxu0 %v244
      %574 = vmatprep.subr.mxu0 %v249
      %575 = vmatpush1.msra.mxu0 %v248
      %576 = vmatprep.subr.mxu0 %v253
      %577 = vmatpush1.msra.mxu0 %v252
      %578 = vmatprep.subr.mxu0 %v257
      %579 = vmatpush1.msra.mxu0 %v256
      %580 = vmatprep.subr.mxu0 %v261
      %581 = vmatpush1.msra.mxu0 %v260
      %582 = vmatprep.subr.mxu0 %v265
      %583 = vmatpush1.msra.mxu0 %v264
      %584 = vmatprep.subr.mxu0 0.0
      %585 = vmatpush1.msra.mxu0 0.0
      %586 = vmatprep.subr.mxu0 0.0
      %587 = vmatpush1.msra.mxu0 0.0
      %588 = vmatprep.subr.mxu0 0.0
      %589 = vmatpush1.msra.mxu0 0.0
      %590 = vmatprep.subr.mxu0 0.0
      %591 = vmatpush1.msra.mxu0 0.0
      %592 = vmatprep.subr.mxu0 0.0
      %593 = vmatpush1.msra.mxu0 0.0
      %594 = vmatprep.subr.mxu0 0.0
      %595 = vmatpush1.msra.mxu0 0.0
      %596 = vmatprep.subr.mxu0 0.0
      %597 = vmatpush1.msra.mxu0 0.0
      %598 = vmatprep.subr.mxu0 0.0
      %599 = vmatpush1.msra.mxu0 0.0
      %600 = vmatprep.subr.mxu0 0.0
      %601 = vmatpush1.msra.mxu0 0.0
      %602 = vmatprep.subr.mxu0 0.0
      %603 = vmatpush1.msra.mxu0 0.0
      %604 = vmatprep.subr.mxu0 0.0
      %605 = vmatpush1.msra.mxu0 0.0
      %606 = vmatprep.subr.mxu0 0.0
      %607 = vmatpush1.msra.mxu0 0.0
      %608 = vmatprep.subr.mxu0 0.0
      %609 = vmatpush1.msra.mxu0 0.0
      %610 = vmatprep.subr.mxu0 0.0
      %611 = vmatpush1.msra.mxu0 0.0
      %612 = vmatprep.subr.mxu0 0.0
      %613 = vmatpush1.msra.mxu0 0.0
      %614 = vmatprep.subr.mxu0 0.0
      %615 = vmatpush1.msra.mxu0 0.0
      %616 = vmatprep.mubr.f32.mxu0 0.0
      %617 = vmatmul.mubr.f32.gmra.mrb[0].mxu0 %v533
      %v618 = vpop.f32.mrb[0].mxu0
      %v619 = vadd.f32 0.0, %v618
      %v620 = vpop.f32.mrb[0].mxu0
      %v621 = vadd.f32 0.0, %v620
      %622 = vmatprep.mubr.f32.mxu0 0.0
      %623 = vmatmul.mubr.f32.gmra.mrb[0].mxu0 %v534
      %v624 = vpop.f32.mrb[0].mxu0
      %v625 = vadd.f32 0.0, %v624
      %v626 = vpop.f32.mrb[0].mxu0
      %v627 = vadd.f32 0.0, %v626
      %628 = vmatprep.mubr.f32.mxu0 0.0
      %629 = vmatmul.mubr.f32.gmra.mrb[0].mxu0 %v535
      %v630 = vpop.f32.mrb[0].mxu0
      %v631 = vadd.f32 0.0, %v630
      %v632 = vpop.f32.mrb[0].mxu0
      %v633 = vadd.f32 0.0, %v632
      %634 = vdwg.mxu0
      %635 = vmatprep.subr.mxu0 %v207
      %636 = vmatpush1.msra.mxu0 %v206
      %637 = vmatprep.subr.mxu0 %v211
      %638 = vmatpush1.msra.mxu0 %v210
      %639 = vmatprep.subr.mxu0 %v215
      %640 = vmatpush1.msra.mxu0 %v214
      %641 = vmatprep.subr.mxu0 %v219
      %642 = vmatpush1.msra.mxu0 %v218
      %643 = vmatprep.subr.mxu0 %v223
      %644 = vmatpush1.msra.mxu0 %v222
      %645 = vmatprep.subr.mxu0 %v227
      %646 = vmatpush1.msra.mxu0 %v226
      %647 = vmatprep.subr.mxu0 %v231
      %648 = vmatpush1.msra.mxu0 %v230
      %649 = vmatprep.subr.mxu0 %v235
      %650 = vmatpush1.msra.mxu0 %v234
      %651 = vmatprep.subr.mxu0 %v239
      %652 = vmatpush1.msra.mxu0 %v238
      %653 = vmatprep.subr.mxu0 %v243
      %654 = vmatpush1.msra.mxu0 %v242
      %655 = vmatprep.subr.mxu0 %v247
      %656 = vmatpush1.msra.mxu0 %v246
      %657 = vmatprep.subr.mxu0 %v251
      %658 = vmatpush1.msra.mxu0 %v250
      %659 = vmatprep.subr.mxu0 %v255
      %660 = vmatpush1.msra.mxu0 %v254
      %661 = vmatprep.subr.mxu0 %v259
      %662 = vmatpush1.msra.mxu0 %v258
      %663 = vmatprep.subr.mxu0 %v263
      %664 = vmatpush1.msra.mxu0 %v262
      %665 = vmatprep.subr.mxu0 %v267
      %666 = vmatpush1.msra.mxu0 %v266
      %667 = vmatprep.subr.mxu0 0.0
      %668 = vmatpush1.msra.mxu0 0.0
      %669 = vmatprep.subr.mxu0 0.0
      %670 = vmatpush1.msra.mxu0 0.0
      %671 = vmatprep.subr.mxu0 0.0
      %672 = vmatpush1.msra.mxu0 0.0
      %673 = vmatprep.subr.mxu0 0.0
      %674 = vmatpush1.msra.mxu0 0.0
      %675 = vmatprep.subr.mxu0 0.0
      %676 = vmatpush1.msra.mxu0 0.0
      %677 = vmatprep.subr.mxu0 0.0
      %678 = vmatpush1.msra.mxu0 0.0
      %679 = vmatprep.subr.mxu0 0.0
      %680 = vmatpush1.msra.mxu0 0.0
      %681 = vmatprep.subr.mxu0 0.0
      %682 = vmatpush1.msra.mxu0 0.0
      %683 = vmatprep.subr.mxu0 0.0
      %684 = vmatpush1.msra.mxu0 0.0
      %685 = vmatprep.subr.mxu0 0.0
      %686 = vmatpush1.msra.mxu0 0.0
      %687 = vmatprep.subr.mxu0 0.0
      %688 = vmatpush1.msra.mxu0 0.0
      %689 = vmatprep.subr.mxu0 0.0
      %690 = vmatpush1.msra.mxu0 0.0
      %691 = vmatprep.subr.mxu0 0.0
      %692 = vmatpush1.msra.mxu0 0.0
      %693 = vmatprep.subr.mxu0 0.0
      %694 = vmatpush1.msra.mxu0 0.0
      %695 = vmatprep.subr.mxu0 0.0
      %696 = vmatpush1.msra.mxu0 0.0
      %697 = vmatprep.subr.mxu0 0.0
      %698 = vmatpush1.msra.mxu0 0.0
      %699 = vmatprep.mubr.f32.mxu0 0.0
      %700 = vmatmul.mubr.f32.gmra.mrb[0].mxu0 %v533
      %v701 = vpop.f32.mrb[0].mxu0
      %v702 = vadd.f32 0.0, %v701
      %v703 = vpop.f32.mrb[0].mxu0
      %v704 = vadd.f32 0.0, %v703
      %705 = vmatprep.mubr.f32.mxu0 0.0
      %706 = vmatmul.mubr.f32.gmra.mrb[0].mxu0 %v534
      %v707 = vpop.f32.mrb[0].mxu0
      %v708 = vadd.f32 0.0, %v707
      %v709 = vpop.f32.mrb[0].mxu0
      %v710 = vadd.f32 0.0, %v709
      %711 = vmatprep.mubr.f32.mxu0 0.0
      %712 = vmatmul.mubr.f32.gmra.mrb[0].mxu0 %v535
      %v713 = vpop.f32.mrb[0].mxu0
      %v714 = vadd.f32 0.0, %v713
      %v715 = vpop.f32.mrb[0].mxu0
      %v716 = vadd.f32 0.0, %v715
      %717 = vdwg.mxu0
      %v718 = vadd.f32 %v540, %v619
      %v719 = vadd.f32 %v541, %v621
      %v720 = vadd.f32 %v542, %v702
      %v721 = vadd.f32 %v543, %v704
      %v722 = vadd.f32 %v544, %v625
      %v723 = vadd.f32 %v545, %v627
      %v724 = vadd.f32 %v546, %v708
      %v725 = vadd.f32 %v547, %v710
      %v726 = vadd.f32 %v548, %v631
      %v727 = vadd.f32 %v549, %v633
      %v728 = vadd.f32 %v550, %v714
      %v729 = vadd.f32 %v551, %v716
      %v730 = vxor.u32 %v718, 2147483648
      %v731 = vxor.u32 %v722, 2147483648
      %v732 = vxor.u32 %v726, 2147483648
      %v733 = vmul.f32 %v730, 1.442695
      %v734 = vpow.pop %v733
      %v735 = vmul.f32 %v731, 1.442695
      %v736 = vpow.pop %v735
      %v737 = vmul.f32 %v732, 1.442695
      %v738 = vpow.pop %v737
      %v739 = vadd.f32 %v734, 1.0
      %v740 = vadd.f32 %v736, 1.0
      %v741 = vadd.f32 %v738, 1.0
      %v742 = vrcp.pop %v739
      %v743 = vmul.f32 1.0, %v742
      %v744 = vrcp.pop %v740
      %v745 = vmul.f32 1.0, %v744
      %v746 = vrcp.pop %v741
      %v747 = vmul.f32 1.0, %v746
      %v748 = vxor.u32 %v719, 2147483648
      %v749 = vxor.u32 %v723, 2147483648
      %v750 = vxor.u32 %v727, 2147483648
      %v751 = vmul.f32 %v748, 1.442695
      %v752 = vpow.pop %v751
      %v753 = vmul.f32 %v749, 1.442695
      %v754 = vpow.pop %v753
      %v755 = vmul.f32 %v750, 1.442695
      %v756 = vpow.pop %v755
      %v757 = vadd.f32 %v752, 1.0
      %v758 = vadd.f32 %v754, 1.0
      %v759 = vadd.f32 %v756, 1.0
      %v760 = vrcp.pop %v757
      %v761 = vmul.f32 1.0, %v760
      %v762 = vrcp.pop %v758
      %v763 = vmul.f32 1.0, %v762
      %v764 = vrcp.pop %v759
      %v765 = vmul.f32 1.0, %v764
      %v766 = vtanh.pop %v720
      %v767 = vtanh.pop %v724
      %v768 = vtanh.pop %v728
      %v769 = vxor.u32 %v721, 2147483648
      %v770 = vxor.u32 %v725, 2147483648
      %v771 = vxor.u32 %v729, 2147483648
      %v772 = vmul.f32 %v769, 1.442695
      %v773 = vpow.pop %v772
      %v774 = vmul.f32 %v770, 1.442695
      %v775 = vpow.pop %v774
      %v776 = vmul.f32 %v771, 1.442695
      %v777 = vpow.pop %v776
      %v778 = vadd.f32 %v773, 1.0
      %v779 = vadd.f32 %v775, 1.0
      %v780 = vadd.f32 %v777, 1.0
      %v781 = vrcp.pop %v778
      %v782 = vmul.f32 1.0, %v781
      %v783 = vrcp.pop %v779
      %v784 = vmul.f32 1.0, %v783
      %v785 = vrcp.pop %v780
      %v786 = vmul.f32 1.0, %v785
      %v787 = vmul.f32 %v761, %v527
      %v788 = vmul.f32 %v763, %v528
      %v789 = vmul.f32 %v765, %v529
      %v790 = vmul.f32 %v743, %v766
      %v791 = vmul.f32 %v745, %v767
      %v792 = vmul.f32 %v747, %v768
      %v793 = vadd.f32 %v787, %v790
      %v794 = vadd.f32 %v788, %v791
      %v795 = vadd.f32 %v789, %v792
      %v796 = vtanh.pop %v793
      %v797 = vtanh.pop %v794
      %v798 = vtanh.pop %v795
      %v799 = vmul.f32 %v782, %v796
      %v800 = vmul.f32 %v784, %v797
      %v801 = vmul.f32 %v786, %v798
      %s802 = scalar_lea.vmem %s191, 24
      %803 = vst [vmem:[%s802] sm:$0xff] %v799
      %804 = vst [vmem:[%s802 + $0x8] sm:$0xff] %v800
      %805 = vst [vmem:[%s802 + $0x10] sm:$0xff] %v801
      %s806 = scalar_lea.vmem %s179, 192
      %v807 = vld [vmem:[%s806] sm:$0xff]
      %v808 = vld [vmem:[%s806 + $0x8] sm:$0xff]
      %v809 = vld [vmem:[%s806 + $0x10] sm:$0xff]
      %v810 = vld [vmem:[%s806 + $0x18] sm:$0xff]
      %v811 = vld [vmem:[%s806 + $0x20] sm:$0xff]
      %v812 = vld [vmem:[%s806 + $0x28] sm:$0xff]
      %v813 = vld [vmem:[%s806 + $0x30] sm:$0xff]
      %v814 = vld [vmem:[%s806 + $0x38] sm:$0xff]
      %v815 = vld [vmem:[%s806 + $0x40] sm:$0xff]
      %v816 = vld [vmem:[%s806 + $0x48] sm:$0xff]
      %v817 = vld [vmem:[%s806 + $0x50] sm:$0xff]
      %v818 = vld [vmem:[%s806 + $0x58] sm:$0xff]
      %819 = vmatprep.subr.mxu0 %v205
      %820 = vmatpush1.msra.mxu0 %v204
      %821 = vmatprep.subr.mxu0 %v209
      %822 = vmatpush1.msra.mxu0 %v208
      %823 = vmatprep.subr.mxu0 %v213
      %824 = vmatpush1.msra.mxu0 %v212
      %825 = vmatprep.subr.mxu0 %v217
      %826 = vmatpush1.msra.mxu0 %v216
      %827 = vmatprep.subr.mxu0 %v221
      %828 = vmatpush1.msra.mxu0 %v220
      %829 = vmatprep.subr.mxu0 %v225
      %830 = vmatpush1.msra.mxu0 %v224
      %831 = vmatprep.subr.mxu0 %v229
      %832 = vmatpush1.msra.mxu0 %v228
      %833 = vmatprep.subr.mxu0 %v233
      %834 = vmatpush1.msra.mxu0 %v232
      %835 = vmatprep.subr.mxu0 %v237
      %836 = vmatpush1.msra.mxu0 %v236
      %837 = vmatprep.subr.mxu0 %v241
      %838 = vmatpush1.msra.mxu0 %v240
      %839 = vmatprep.subr.mxu0 %v245
      %840 = vmatpush1.msra.mxu0 %v244
      %841 = vmatprep.subr.mxu0 %v249
      %842 = vmatpush1.msra.mxu0 %v248
      %843 = vmatprep.subr.mxu0 %v253
      %844 = vmatpush1.msra.mxu0 %v252
      %845 = vmatprep.subr.mxu0 %v257
      %846 = vmatpush1.msra.mxu0 %v256
      %847 = vmatprep.subr.mxu0 %v261
      %848 = vmatpush1.msra.mxu0 %v260
      %849 = vmatprep.subr.mxu0 %v265
      %850 = vmatpush1.msra.mxu0 %v264
      %851 = vmatprep.subr.mxu0 0.0
      %852 = vmatpush1.msra.mxu0 0.0
      %853 = vmatprep.subr.mxu0 0.0
      %854 = vmatpush1.msra.mxu0 0.0
      %855 = vmatprep.subr.mxu0 0.0
      %856 = vmatpush1.msra.mxu0 0.0
      %857 = vmatprep.subr.mxu0 0.0
      %858 = vmatpush1.msra.mxu0 0.0
      %859 = vmatprep.subr.mxu0 0.0
      %860 = vmatpush1.msra.mxu0 0.0
      %861 = vmatprep.subr.mxu0 0.0
      %862 = vmatpush1.msra.mxu0 0.0
      %863 = vmatprep.subr.mxu0 0.0
      %864 = vmatpush1.msra.mxu0 0.0
      %865 = vmatprep.subr.mxu0 0.0
      %866 = vmatpush1.msra.mxu0 0.0
      %867 = vmatprep.subr.mxu0 0.0
      %868 = vmatpush1.msra.mxu0 0.0
      %869 = vmatprep.subr.mxu0 0.0
      %870 = vmatpush1.msra.mxu0 0.0
      %871 = vmatprep.subr.mxu0 0.0
      %872 = vmatpush1.msra.mxu0 0.0
      %873 = vmatprep.subr.mxu0 0.0
      %874 = vmatpush1.msra.mxu0 0.0
      %875 = vmatprep.subr.mxu0 0.0
      %876 = vmatpush1.msra.mxu0 0.0
      %877 = vmatprep.subr.mxu0 0.0
      %878 = vmatpush1.msra.mxu0 0.0
      %879 = vmatprep.subr.mxu0 0.0
      %880 = vmatpush1.msra.mxu0 0.0
      %881 = vmatprep.subr.mxu0 0.0
      %882 = vmatpush1.msra.mxu0 0.0
      %883 = vmatprep.mubr.f32.mxu0 0.0
      %884 = vmatmul.mubr.f32.gmra.mrb[0].mxu0 %v799
      %v885 = vpop.f32.mrb[0].mxu0
      %v886 = vadd.f32 0.0, %v885
      %v887 = vpop.f32.mrb[0].mxu0
      %v888 = vadd.f32 0.0, %v887
      %889 = vmatprep.mubr.f32.mxu0 0.0
      %890 = vmatmul.mubr.f32.gmra.mrb[0].mxu0 %v800
      %v891 = vpop.f32.mrb[0].mxu0
      %v892 = vadd.f32 0.0, %v891
      %v893 = vpop.f32.mrb[0].mxu0
      %v894 = vadd.f32 0.0, %v893
      %895 = vmatprep.mubr.f32.mxu0 0.0
      %896 = vmatmul.mubr.f32.gmra.mrb[0].mxu0 %v801
      %v897 = vpop.f32.mrb[0].mxu0
      %v898 = vadd.f32 0.0, %v897
      %v899 = vpop.f32.mrb[0].mxu0
      %v900 = vadd.f32 0.0, %v899
      %901 = vdwg.mxu0
      %902 = vmatprep.subr.mxu0 %v207
      %903 = vmatpush1.msra.mxu0 %v206
      %904 = vmatprep.subr.mxu0 %v211
      %905 = vmatpush1.msra.mxu0 %v210
      %906 = vmatprep.subr.mxu0 %v215
      %907 = vmatpush1.msra.mxu0 %v214
      %908 = vmatprep.subr.mxu0 %v219
      %909 = vmatpush1.msra.mxu0 %v218
      %910 = vmatprep.subr.mxu0 %v223
      %911 = vmatpush1.msra.mxu0 %v222
      %912 = vmatprep.subr.mxu0 %v227
      %913 = vmatpush1.msra.mxu0 %v226
      %914 = vmatprep.subr.mxu0 %v231
      %915 = vmatpush1.msra.mxu0 %v230
      %916 = vmatprep.subr.mxu0 %v235
      %917 = vmatpush1.msra.mxu0 %v234
      %918 = vmatprep.subr.mxu0 %v239
      %919 = vmatpush1.msra.mxu0 %v238
      %920 = vmatprep.subr.mxu0 %v243
      %921 = vmatpush1.msra.mxu0 %v242
      %922 = vmatprep.subr.mxu0 %v247
      %923 = vmatpush1.msra.mxu0 %v246
      %924 = vmatprep.subr.mxu0 %v251
      %925 = vmatpush1.msra.mxu0 %v250
      %926 = vmatprep.subr.mxu0 %v255
      %927 = vmatpush1.msra.mxu0 %v254
      %928 = vmatprep.subr.mxu0 %v259
      %929 = vmatpush1.msra.mxu0 %v258
      %930 = vmatprep.subr.mxu0 %v263
      %931 = vmatpush1.msra.mxu0 %v262
      %932 = vmatprep.subr.mxu0 %v267
      %933 = vmatpush1.msra.mxu0 %v266
      %934 = vmatprep.subr.mxu0 0.0
      %935 = vmatpush1.msra.mxu0 0.0
      %936 = vmatprep.subr.mxu0 0.0
      %937 = vmatpush1.msra.mxu0 0.0
      %938 = vmatprep.subr.mxu0 0.0
      %939 = vmatpush1.msra.mxu0 0.0
      %940 = vmatprep.subr.mxu0 0.0
      %941 = vmatpush1.msra.mxu0 0.0
      %942 = vmatprep.subr.mxu0 0.0
      %943 = vmatpush1.msra.mxu0 0.0
      %944 = vmatprep.subr.mxu0 0.0
      %945 = vmatpush1.msra.mxu0 0.0
      %946 = vmatprep.subr.mxu0 0.0
      %947 = vmatpush1.msra.mxu0 0.0
      %948 = vmatprep.subr.mxu0 0.0
      %949 = vmatpush1.msra.mxu0 0.0
      %950 = vmatprep.subr.mxu0 0.0
      %951 = vmatpush1.msra.mxu0 0.0
      %952 = vmatprep.subr.mxu0 0.0
      %953 = vmatpush1.msra.mxu0 0.0
      %954 = vmatprep.subr.mxu0 0.0
      %955 = vmatpush1.msra.mxu0 0.0
      %956 = vmatprep.subr.mxu0 0.0
      %957 = vmatpush1.msra.mxu0 0.0
      %958 = vmatprep.subr.mxu0 0.0
      %959 = vmatpush1.msra.mxu0 0.0
      %960 = vmatprep.subr.mxu0 0.0
      %961 = vmatpush1.msra.mxu0 0.0
      %962 = vmatprep.subr.mxu0 0.0
      %963 = vmatpush1.msra.mxu0 0.0
      %964 = vmatprep.subr.mxu0 0.0
      %965 = vmatpush1.msra.mxu0 0.0
      %966 = vmatprep.mubr.f32.mxu0 0.0
      %967 = vmatmul.mubr.f32.gmra.mrb[0].mxu0 %v799
      %v968 = vpop.f32.mrb[0].mxu0
      %v969 = vadd.f32 0.0, %v968
      %v970 = vpop.f32.mrb[0].mxu0
      %v971 = vadd.f32 0.0, %v970
      %972 = vmatprep.mubr.f32.mxu0 0.0
      %973 = vmatmul.mubr.f32.gmra.mrb[0].mxu0 %v800
      %v974 = vpop.f32.mrb[0].mxu0
      %v975 = vadd.f32 0.0, %v974
      %v976 = vpop.f32.mrb[0].mxu0
      %v977 = vadd.f32 0.0, %v976
      %978 = vmatprep.mubr.f32.mxu0 0.0
      %979 = vmatmul.mubr.f32.gmra.mrb[0].mxu0 %v801
      %v980 = vpop.f32.mrb[0].mxu0
      %v981 = vadd.f32 0.0, %v980
      %v982 = vpop.f32.mrb[0].mxu0
      %v983 = vadd.f32 0.0, %v982
      %984 = vdwg.mxu0
      %v985 = vadd.f32 %v807, %v886
      %v986 = vadd.f32 %v808, %v888
      %v987 = vadd.f32 %v809, %v969
      %v988 = vadd.f32 %v810, %v971
      %v989 = vadd.f32 %v811, %v892
      %v990 = vadd.f32 %v812, %v894
      %v991 = vadd.f32 %v813, %v975
      %v992 = vadd.f32 %v814, %v977
      %v993 = vadd.f32 %v815, %v898
      %v994 = vadd.f32 %v816, %v900
      %v995 = vadd.f32 %v817, %v981
      %v996 = vadd.f32 %v818, %v983
      %v997 = vxor.u32 %v985, 2147483648
      %v998 = vxor.u32 %v989, 2147483648
      %v999 = vxor.u32 %v993, 2147483648
      %v1000 = vmul.f32 %v997, 1.442695
      %v1001 = vpow.pop %v1000
      %v1002 = vmul.f32 %v998, 1.442695
      %v1003 = vpow.pop %v1002
      %v1004 = vmul.f32 %v999, 1.442695
      %v1005 = vpow.pop %v1004
      %v1006 = vadd.f32 %v1001, 1.0
      %v1007 = vadd.f32 %v1003, 1.0
      %v1008 = vadd.f32 %v1005, 1.0
      %v1009 = vrcp.pop %v1006
      %v1010 = vmul.f32 1.0, %v1009
      %v1011 = vrcp.pop %v1007
      %v1012 = vmul.f32 1.0, %v1011
      %v1013 = vrcp.pop %v1008
      %v1014 = vmul.f32 1.0, %v1013
      %v1015 = vxor.u32 %v986, 2147483648
      %v1016 = vxor.u32 %v990, 2147483648
      %v1017 = vxor.u32 %v994, 2147483648
      %v1018 = vmul.f32 %v1015, 1.442695
      %v1019 = vpow.pop %v1018
      %v1020 = vmul.f32 %v1016, 1.442695
      %v1021 = vpow.pop %v1020
      %v1022 = vmul.f32 %v1017, 1.442695
      %v1023 = vpow.pop %v1022
      %v1024 = vadd.f32 %v1019, 1.0
      %v1025 = vadd.f32 %v1021, 1.0
      %v1026 = vadd.f32 %v1023, 1.0
      %v1027 = vrcp.pop %v1024
      %v1028 = vmul.f32 1.0, %v1027
      %v1029 = vrcp.pop %v1025
      %v1030 = vmul.f32 1.0, %v1029
      %v1031 = vrcp.pop %v1026
      %v1032 = vmul.f32 1.0, %v1031
      %v1033 = vtanh.pop %v987
      %v1034 = vtanh.pop %v991
      %v1035 = vtanh.pop %v995
      %v1036 = vxor.u32 %v988, 2147483648
      %v1037 = vxor.u32 %v992, 2147483648
      %v1038 = vxor.u32 %v996, 2147483648
      %v1039 = vmul.f32 %v1036, 1.442695
      %v1040 = vpow.pop %v1039
      %v1041 = vmul.f32 %v1037, 1.442695
      %v1042 = vpow.pop %v1041
      %v1043 = vmul.f32 %v1038, 1.442695
      %v1044 = vpow.pop %v1043
      %v1045 = vadd.f32 %v1040, 1.0
      %v1046 = vadd.f32 %v1042, 1.0
      %v1047 = vadd.f32 %v1044, 1.0
      %v1048 = vrcp.pop %v1045
      %v1049 = vmul.f32 1.0, %v1048
      %v1050 = vrcp.pop %v1046
      %v1051 = vmul.f32 1.0, %v1050
      %v1052 = vrcp.pop %v1047
      %v1053 = vmul.f32 1.0, %v1052
      %v1054 = vmul.f32 %v1028, %v793
      %v1055 = vmul.f32 %v1030, %v794
      %v1056 = vmul.f32 %v1032, %v795
      %v1057 = vmul.f32 %v1010, %v1033
      %v1058 = vmul.f32 %v1012, %v1034
      %v1059 = vmul.f32 %v1014, %v1035
      %v1060 = vadd.f32 %v1054, %v1057
      %v1061 = vadd.f32 %v1055, %v1058
      %v1062 = vadd.f32 %v1056, %v1059
      %v1063 = vtanh.pop %v1060
      %v1064 = vtanh.pop %v1061
      %v1065 = vtanh.pop %v1062
      %v1066 = vmul.f32 %v1049, %v1063
      %v1067 = vmul.f32 %v1051, %v1064
      %v1068 = vmul.f32 %v1053, %v1065
      %s1069 = scalar_lea.vmem %s191, 48
      %1070 = vst [vmem:[%s1069] sm:$0xff] %v1066
      %1071 = vst [vmem:[%s1069 + $0x8] sm:$0xff] %v1067
      %1072 = vst [vmem:[%s1069 + $0x10] sm:$0xff] %v1068
      %s1073 = scalar_lea.vmem %s179, 288
      %v1074 = vld [vmem:[%s1073] sm:$0xff]
      %v1075 = vld [vmem:[%s1073 + $0x8] sm:$0xff]
      %v1076 = vld [vmem:[%s1073 + $0x10] sm:$0xff]
      %v1077 = vld [vmem:[%s1073 + $0x18] sm:$0xff]
      %v1078 = vld [vmem:[%s1073 + $0x20] sm:$0xff]
      %v1079 = vld [vmem:[%s1073 + $0x28] sm:$0xff]
      %v1080 = vld [vmem:[%s1073 + $0x30] sm:$0xff]
      %v1081 = vld [vmem:[%s1073 + $0x38] sm:$0xff]
      %v1082 = vld [vmem:[%s1073 + $0x40] sm:$0xff]
      %v1083 = vld [vmem:[%s1073 + $0x48] sm:$0xff]
      %v1084 = vld [vmem:[%s1073 + $0x50] sm:$0xff]
      %v1085 = vld [vmem:[%s1073 + $0x58] sm:$0xff]
      %1086 = vmatprep.subr.mxu0 %v205
      %1087 = vmatpush1.msra.mxu0 %v204
      %1088 = vmatprep.subr.mxu0 %v209
      %1089 = vmatpush1.msra.mxu0 %v208
      %1090 = vmatprep.subr.mxu0 %v213
      %1091 = vmatpush1.msra.mxu0 %v212
      %1092 = vmatprep.subr.mxu0 %v217
      %1093 = vmatpush1.msra.mxu0 %v216
      %1094 = vmatprep.subr.mxu0 %v221
      %1095 = vmatpush1.msra.mxu0 %v220
      %1096 = vmatprep.subr.mxu0 %v225
      %1097 = vmatpush1.msra.mxu0 %v224
      %1098 = vmatprep.subr.mxu0 %v229
      %1099 = vmatpush1.msra.mxu0 %v228
      %1100 = vmatprep.subr.mxu0 %v233
      %1101 = vmatpush1.msra.mxu0 %v232
      %1102 = vmatprep.subr.mxu0 %v237
      %1103 = vmatpush1.msra.mxu0 %v236
      %1104 = vmatprep.subr.mxu0 %v241
      %1105 = vmatpush1.msra.mxu0 %v240
      %1106 = vmatprep.subr.mxu0 %v245
      %1107 = vmatpush1.msra.mxu0 %v244
      %1108 = vmatprep.subr.mxu0 %v249
      %1109 = vmatpush1.msra.mxu0 %v248
      %1110 = vmatprep.subr.mxu0 %v253
      %1111 = vmatpush1.msra.mxu0 %v252
      %1112 = vmatprep.subr.mxu0 %v257
      %1113 = vmatpush1.msra.mxu0 %v256
      %1114 = vmatprep.subr.mxu0 %v261
      %1115 = vmatpush1.msra.mxu0 %v260
      %1116 = vmatprep.subr.mxu0 %v265
      %1117 = vmatpush1.msra.mxu0 %v264
      %1118 = vmatprep.subr.mxu0 0.0
      %1119 = vmatpush1.msra.mxu0 0.0
      %1120 = vmatprep.subr.mxu0 0.0
      %1121 = vmatpush1.msra.mxu0 0.0
      %1122 = vmatprep.subr.mxu0 0.0
      %1123 = vmatpush1.msra.mxu0 0.0
      %1124 = vmatprep.subr.mxu0 0.0
      %1125 = vmatpush1.msra.mxu0 0.0
      %1126 = vmatprep.subr.mxu0 0.0
      %1127 = vmatpush1.msra.mxu0 0.0
      %1128 = vmatprep.subr.mxu0 0.0
      %1129 = vmatpush1.msra.mxu0 0.0
      %1130 = vmatprep.subr.mxu0 0.0
      %1131 = vmatpush1.msra.mxu0 0.0
      %1132 = vmatprep.subr.mxu0 0.0
      %1133 = vmatpush1.msra.mxu0 0.0
      %1134 = vmatprep.subr.mxu0 0.0
      %1135 = vmatpush1.msra.mxu0 0.0
      %1136 = vmatprep.subr.mxu0 0.0
      %1137 = vmatpush1.msra.mxu0 0.0
      %1138 = vmatprep.subr.mxu0 0.0
      %1139 = vmatpush1.msra.mxu0 0.0
      %1140 = vmatprep.subr.mxu0 0.0
      %1141 = vmatpush1.msra.mxu0 0.0
      %1142 = vmatprep.subr.mxu0 0.0
      %1143 = vmatpush1.msra.mxu0 0.0
      %1144 = vmatprep.subr.mxu0 0.0
      %1145 = vmatpush1.msra.mxu0 0.0
      %1146 = vmatprep.subr.mxu0 0.0
      %1147 = vmatpush1.msra.mxu0 0.0
      %1148 = vmatprep.subr.mxu0 0.0
      %1149 = vmatpush1.msra.mxu0 0.0
      %1150 = vmatprep.mubr.f32.mxu0 0.0
      %1151 = vmatmul.mubr.f32.gmra.mrb[0].mxu0 %v1066
      %v1152 = vpop.f32.mrb[0].mxu0
      %v1153 = vadd.f32 0.0, %v1152
      %v1154 = vpop.f32.mrb[0].mxu0
      %v1155 = vadd.f32 0.0, %v1154
      %1156 = vmatprep.mubr.f32.mxu0 0.0
      %1157 = vmatmul.mubr.f32.gmra.mrb[0].mxu0 %v1067
      %v1158 = vpop.f32.mrb[0].mxu0
      %v1159 = vadd.f32 0.0, %v1158
      %v1160 = vpop.f32.mrb[0].mxu0
      %v1161 = vadd.f32 0.0, %v1160
      %1162 = vmatprep.mubr.f32.mxu0 0.0
      %1163 = vmatmul.mubr.f32.gmra.mrb[0].mxu0 %v1068
      %v1164 = vpop.f32.mrb[0].mxu0
      %v1165 = vadd.f32 0.0, %v1164
      %v1166 = vpop.f32.mrb[0].mxu0
      %v1167 = vadd.f32 0.0, %v1166
      %1168 = vdwg.mxu0
      %1169 = vmatprep.subr.mxu0 %v207
      %1170 = vmatpush1.msra.mxu0 %v206
      %1171 = vmatprep.subr.mxu0 %v211
      %1172 = vmatpush1.msra.mxu0 %v210
      %1173 = vmatprep.subr.mxu0 %v215
      %1174 = vmatpush1.msra.mxu0 %v214
      %1175 = vmatprep.subr.mxu0 %v219
      %1176 = vmatpush1.msra.mxu0 %v218
      %1177 = vmatprep.subr.mxu0 %v223
      %1178 = vmatpush1.msra.mxu0 %v222
      %1179 = vmatprep.subr.mxu0 %v227
      %1180 = vmatpush1.msra.mxu0 %v226
      %1181 = vmatprep.subr.mxu0 %v231
      %1182 = vmatpush1.msra.mxu0 %v230
      %1183 = vmatprep.subr.mxu0 %v235
      %1184 = vmatpush1.msra.mxu0 %v234
      %1185 = vmatprep.subr.mxu0 %v239
      %1186 = vmatpush1.msra.mxu0 %v238
      %1187 = vmatprep.subr.mxu0 %v243
      %1188 = vmatpush1.msra.mxu0 %v242
      %1189 = vmatprep.subr.mxu0 %v247
      %1190 = vmatpush1.msra.mxu0 %v246
      %1191 = vmatprep.subr.mxu0 %v251
      %1192 = vmatpush1.msra.mxu0 %v250
      %1193 = vmatprep.subr.mxu0 %v255
      %1194 = vmatpush1.msra.mxu0 %v254
      %1195 = vmatprep.subr.mxu0 %v259
      %1196 = vmatpush1.msra.mxu0 %v258
      %1197 = vmatprep.subr.mxu0 %v263
      %1198 = vmatpush1.msra.mxu0 %v262
      %1199 = vmatprep.subr.mxu0 %v267
      %1200 = vmatpush1.msra.mxu0 %v266
      %1201 = vmatprep.subr.mxu0 0.0
      %1202 = vmatpush1.msra.mxu0 0.0
      %1203 = vmatprep.subr.mxu0 0.0
      %1204 = vmatpush1.msra.mxu0 0.0
      %1205 = vmatprep.subr.mxu0 0.0
      %1206 = vmatpush1.msra.mxu0 0.0
      %1207 = vmatprep.subr.mxu0 0.0
      %1208 = vmatpush1.msra.mxu0 0.0
      %1209 = vmatprep.subr.mxu0 0.0
      %1210 = vmatpush1.msra.mxu0 0.0
      %1211 = vmatprep.subr.mxu0 0.0
      %1212 = vmatpush1.msra.mxu0 0.0
      %1213 = vmatprep.subr.mxu0 0.0
      %1214 = vmatpush1.msra.mxu0 0.0
      %1215 = vmatprep.subr.mxu0 0.0
      %1216 = vmatpush1.msra.mxu0 0.0
      %1217 = vmatprep.subr.mxu0 0.0
      %1218 = vmatpush1.msra.mxu0 0.0
      %1219 = vmatprep.subr.mxu0 0.0
      %1220 = vmatpush1.msra.mxu0 0.0
      %1221 = vmatprep.subr.mxu0 0.0
      %1222 = vmatpush1.msra.mxu0 0.0
      %1223 = vmatprep.subr.mxu0 0.0
      %1224 = vmatpush1.msra.mxu0 0.0
      %1225 = vmatprep.subr.mxu0 0.0
      %1226 = vmatpush1.msra.mxu0 0.0
      %1227 = vmatprep.subr.mxu0 0.0
      %1228 = vmatpush1.msra.mxu0 0.0
      %1229 = vmatprep.subr.mxu0 0.0
      %1230 = vmatpush1.msra.mxu0 0.0
      %1231 = vmatprep.subr.mxu0 0.0
      %1232 = vmatpush1.msra.mxu0 0.0
      %1233 = vmatprep.mubr.f32.mxu0 0.0
      %1234 = vmatmul.mubr.f32.gmra.mrb[0].mxu0 %v1066
      %v1235 = vpop.f32.mrb[0].mxu0
      %v1236 = vadd.f32 0.0, %v1235
      %v1237 = vpop.f32.mrb[0].mxu0
      %v1238 = vadd.f32 0.0, %v1237
      %1239 = vmatprep.mubr.f32.mxu0 0.0
      %1240 = vmatmul.mubr.f32.gmra.mrb[0].mxu0 %v1067
      %v1241 = vpop.f32.mrb[0].mxu0
      %v1242 = vadd.f32 0.0, %v1241
      %v1243 = vpop.f32.mrb[0].mxu0
      %v1244 = vadd.f32 0.0, %v1243
      %1245 = vmatprep.mubr.f32.mxu0 0.0
      %1246 = vmatmul.mubr.f32.gmra.mrb[0].mxu0 %v1068
      %v1247 = vpop.f32.mrb[0].mxu0
      %v1248 = vadd.f32 0.0, %v1247
      %v1249 = vpop.f32.mrb[0].mxu0
      %v1250 = vadd.f32 0.0, %v1249
      %1251 = vdwg.mxu0
      %v1252 = vadd.f32 %v1074, %v1153
      %v1253 = vadd.f32 %v1075, %v1155
      %v1254 = vadd.f32 %v1076, %v1236
      %v1255 = vadd.f32 %v1077, %v1238
      %v1256 = vadd.f32 %v1078, %v1159
      %v1257 = vadd.f32 %v1079, %v1161
      %v1258 = vadd.f32 %v1080, %v1242
      %v1259 = vadd.f32 %v1081, %v1244
      %v1260 = vadd.f32 %v1082, %v1165
      %v1261 = vadd.f32 %v1083, %v1167
      %v1262 = vadd.f32 %v1084, %v1248
      %v1263 = vadd.f32 %v1085, %v1250
      %v1264 = vxor.u32 %v1252, 2147483648
      %v1265 = vxor.u32 %v1256, 2147483648
      %v1266 = vxor.u32 %v1260, 2147483648
      %v1267 = vmul.f32 %v1264, 1.442695
      %v1268 = vpow.pop %v1267
      %v1269 = vmul.f32 %v1265, 1.442695
      %v1270 = vpow.pop %v1269
      %v1271 = vmul.f32 %v1266, 1.442695
      %v1272 = vpow.pop %v1271
      %v1273 = vadd.f32 %v1268, 1.0
      %v1274 = vadd.f32 %v1270, 1.0
      %v1275 = vadd.f32 %v1272, 1.0
      %v1276 = vrcp.pop %v1273
      %v1277 = vmul.f32 1.0, %v1276
      %v1278 = vrcp.pop %v1274
      %v1279 = vmul.f32 1.0, %v1278
      %v1280 = vrcp.pop %v1275
      %v1281 = vmul.f32 1.0, %v1280
      %v1282 = vxor.u32 %v1253, 2147483648
      %v1283 = vxor.u32 %v1257, 2147483648
      %v1284 = vxor.u32 %v1261, 2147483648
      %v1285 = vmul.f32 %v1282, 1.442695
      %v1286 = vpow.pop %v1285
      %v1287 = vmul.f32 %v1283, 1.442695
      %v1288 = vpow.pop %v1287
      %v1289 = vmul.f32 %v1284, 1.442695
      %v1290 = vpow.pop %v1289
      %v1291 = vadd.f32 %v1286, 1.0
      %v1292 = vadd.f32 %v1288, 1.0
      %v1293 = vadd.f32 %v1290, 1.0
      %v1294 = vrcp.pop %v1291
      %v1295 = vmul.f32 1.0, %v1294
      %v1296 = vrcp.pop %v1292
      %v1297 = vmul.f32 1.0, %v1296
      %v1298 = vrcp.pop %v1293
      %v1299 = vmul.f32 1.0, %v1298
      %v1300 = vtanh.pop %v1254
      %v1301 = vtanh.pop %v1258
      %v1302 = vtanh.pop %v1262
      %v1303 = vxor.u32 %v1255, 2147483648
      %v1304 = vxor.u32 %v1259, 2147483648
      %v1305 = vxor.u32 %v1263, 2147483648
      %v1306 = vmul.f32 %v1303, 1.442695
      %v1307 = vpow.pop %v1306
      %v1308 = vmul.f32 %v1304, 1.442695
      %v1309 = vpow.pop %v1308
      %v1310 = vmul.f32 %v1305, 1.442695
      %v1311 = vpow.pop %v1310
      %v1312 = vadd.f32 %v1307, 1.0
      %v1313 = vadd.f32 %v1309, 1.0
      %v1314 = vadd.f32 %v1311, 1.0
      %v1315 = vrcp.pop %v1312
      %v1316 = vmul.f32 1.0, %v1315
      %v1317 = vrcp.pop %v1313
      %v1318 = vmul.f32 1.0, %v1317
      %v1319 = vrcp.pop %v1314
      %v1320 = vmul.f32 1.0, %v1319
      %v1321 = vmul.f32 %v1295, %v1060
      %v1322 = vmul.f32 %v1297, %v1061
      %v1323 = vmul.f32 %v1299, %v1062
      %v1324 = vmul.f32 %v1277, %v1300
      %v1325 = vmul.f32 %v1279, %v1301
      %v1326 = vmul.f32 %v1281, %v1302
      %v1327 = vadd.f32 %v1321, %v1324
      %v1328 = vadd.f32 %v1322, %v1325
      %v1329 = vadd.f32 %v1323, %v1326
      %v1330 = vtanh.pop %v1327
      %v1331 = vtanh.pop %v1328
      %v1332 = vtanh.pop %v1329
      %v1333 = vmul.f32 %v1316, %v1330
      %v1334 = vmul.f32 %v1318, %v1331
      %v1335 = vmul.f32 %v1320, %v1332
      %s1336 = scalar_lea.vmem %s191, 72
      %1337 = vst [vmem:[%s1336] sm:$0xff] %v1333
      %1338 = vst [vmem:[%s1336 + $0x8] sm:$0xff] %v1334
      %1339 = vst [vmem:[%s1336 + $0x10] sm:$0xff] %v1335
      %s1340 = scalar_lea.vmem %s179, 384
      %v1341 = vld [vmem:[%s1340] sm:$0xff]
      %v1342 = vld [vmem:[%s1340 + $0x8] sm:$0xff]
      %v1343 = vld [vmem:[%s1340 + $0x10] sm:$0xff]
      %v1344 = vld [vmem:[%s1340 + $0x18] sm:$0xff]
      %v1345 = vld [vmem:[%s1340 + $0x20] sm:$0xff]
      %v1346 = vld [vmem:[%s1340 + $0x28] sm:$0xff]
      %v1347 = vld [vmem:[%s1340 + $0x30] sm:$0xff]
      %v1348 = vld [vmem:[%s1340 + $0x38] sm:$0xff]
      %v1349 = vld [vmem:[%s1340 + $0x40] sm:$0xff]
      %v1350 = vld [vmem:[%s1340 + $0x48] sm:$0xff]
      %v1351 = vld [vmem:[%s1340 + $0x50] sm:$0xff]
      %v1352 = vld [vmem:[%s1340 + $0x58] sm:$0xff]
      %1353 = vmatprep.subr.mxu0 %v205
      %1354 = vmatpush1.msra.mxu0 %v204
      %1355 = vmatprep.subr.mxu0 %v209
      %1356 = vmatpush1.msra.mxu0 %v208
      %1357 = vmatprep.subr.mxu0 %v213
      %1358 = vmatpush1.msra.mxu0 %v212
      %1359 = vmatprep.subr.mxu0 %v217
      %1360 = vmatpush1.msra.mxu0 %v216
      %1361 = vmatprep.subr.mxu0 %v221
      %1362 = vmatpush1.msra.mxu0 %v220
      %1363 = vmatprep.subr.mxu0 %v225
      %1364 = vmatpush1.msra.mxu0 %v224
      %1365 = vmatprep.subr.mxu0 %v229
      %1366 = vmatpush1.msra.mxu0 %v228
      %1367 = vmatprep.subr.mxu0 %v233
      %1368 = vmatpush1.msra.mxu0 %v232
      %1369 = vmatprep.subr.mxu0 %v237
      %1370 = vmatpush1.msra.mxu0 %v236
      %1371 = vmatprep.subr.mxu0 %v241
      %1372 = vmatpush1.msra.mxu0 %v240
      %1373 = vmatprep.subr.mxu0 %v245
      %1374 = vmatpush1.msra.mxu0 %v244
      %1375 = vmatprep.subr.mxu0 %v249
      %1376 = vmatpush1.msra.mxu0 %v248
      %1377 = vmatprep.subr.mxu0 %v253
      %1378 = vmatpush1.msra.mxu0 %v252
      %1379 = vmatprep.subr.mxu0 %v257
      %1380 = vmatpush1.msra.mxu0 %v256
      %1381 = vmatprep.subr.mxu0 %v261
      %1382 = vmatpush1.msra.mxu0 %v260
      %1383 = vmatprep.subr.mxu0 %v265
      %1384 = vmatpush1.msra.mxu0 %v264
      %1385 = vmatprep.subr.mxu0 0.0
      %1386 = vmatpush1.msra.mxu0 0.0
      %1387 = vmatprep.subr.mxu0 0.0
      %1388 = vmatpush1.msra.mxu0 0.0
      %1389 = vmatprep.subr.mxu0 0.0
      %1390 = vmatpush1.msra.mxu0 0.0
      %1391 = vmatprep.subr.mxu0 0.0
      %1392 = vmatpush1.msra.mxu0 0.0
      %1393 = vmatprep.subr.mxu0 0.0
      %1394 = vmatpush1.msra.mxu0 0.0
      %1395 = vmatprep.subr.mxu0 0.0
      %1396 = vmatpush1.msra.mxu0 0.0
      %1397 = vmatprep.subr.mxu0 0.0
      %1398 = vmatpush1.msra.mxu0 0.0
      %1399 = vmatprep.subr.mxu0 0.0
      %1400 = vmatpush1.msra.mxu0 0.0
      %1401 = vmatprep.subr.mxu0 0.0
      %1402 = vmatpush1.msra.mxu0 0.0
      %1403 = vmatprep.subr.mxu0 0.0
      %1404 = vmatpush1.msra.mxu0 0.0
      %1405 = vmatprep.subr.mxu0 0.0
      %1406 = vmatpush1.msra.mxu0 0.0
      %1407 = vmatprep.subr.mxu0 0.0
      %1408 = vmatpush1.msra.mxu0 0.0
      %1409 = vmatprep.subr.mxu0 0.0
      %1410 = vmatpush1.msra.mxu0 0.0
      %1411 = vmatprep.subr.mxu0 0.0
      %1412 = vmatpush1.msra.mxu0 0.0
      %1413 = vmatprep.subr.mxu0 0.0
      %1414 = vmatpush1.msra.mxu0 0.0
      %1415 = vmatprep.subr.mxu0 0.0
      %1416 = vmatpush1.msra.mxu0 0.0
      %1417 = vmatprep.mubr.f32.mxu0 0.0
      %1418 = vmatmul.mubr.f32.gmra.mrb[0].mxu0 %v1333
      %v1419 = vpop.f32.mrb[0].mxu0
      %v1420 = vadd.f32 0.0, %v1419
      %v1421 = vpop.f32.mrb[0].mxu0
      %v1422 = vadd.f32 0.0, %v1421
      %1423 = vmatprep.mubr.f32.mxu0 0.0
      %1424 = vmatmul.mubr.f32.gmra.mrb[0].mxu0 %v1334
      %v1425 = vpop.f32.mrb[0].mxu0
      %v1426 = vadd.f32 0.0, %v1425
      %v1427 = vpop.f32.mrb[0].mxu0
      %v1428 = vadd.f32 0.0, %v1427
      %1429 = vmatprep.mubr.f32.mxu0 0.0
      %1430 = vmatmul.mubr.f32.gmra.mrb[0].mxu0 %v1335
      %v1431 = vpop.f32.mrb[0].mxu0
      %v1432 = vadd.f32 0.0, %v1431
      %v1433 = vpop.f32.mrb[0].mxu0
      %v1434 = vadd.f32 0.0, %v1433
      %1435 = vdwg.mxu0
      %1436 = vmatprep.subr.mxu0 %v207
      %1437 = vmatpush1.msra.mxu0 %v206
      %1438 = vmatprep.subr.mxu0 %v211
      %1439 = vmatpush1.msra.mxu0 %v210
      %1440 = vmatprep.subr.mxu0 %v215
      %1441 = vmatpush1.msra.mxu0 %v214
      %1442 = vmatprep.subr.mxu0 %v219
      %1443 = vmatpush1.msra.mxu0 %v218
      %1444 = vmatprep.subr.mxu0 %v223
      %1445 = vmatpush1.msra.mxu0 %v222
      %1446 = vmatprep.subr.mxu0 %v227
      %1447 = vmatpush1.msra.mxu0 %v226
      %1448 = vmatprep.subr.mxu0 %v231
      %1449 = vmatpush1.msra.mxu0 %v230
      %1450 = vmatprep.subr.mxu0 %v235
      %1451 = vmatpush1.msra.mxu0 %v234
      %1452 = vmatprep.subr.mxu0 %v239
      %1453 = vmatpush1.msra.mxu0 %v238
      %1454 = vmatprep.subr.mxu0 %v243
      %1455 = vmatpush1.msra.mxu0 %v242
      %1456 = vmatprep.subr.mxu0 %v247
      %1457 = vmatpush1.msra.mxu0 %v246
      %1458 = vmatprep.subr.mxu0 %v251
      %1459 = vmatpush1.msra.mxu0 %v250
      %1460 = vmatprep.subr.mxu0 %v255
      %1461 = vmatpush1.msra.mxu0 %v254
      %1462 = vmatprep.subr.mxu0 %v259
      %1463 = vmatpush1.msra.mxu0 %v258
      %1464 = vmatprep.subr.mxu0 %v263
      %1465 = vmatpush1.msra.mxu0 %v262
      %1466 = vmatprep.subr.mxu0 %v267
      %1467 = vmatpush1.msra.mxu0 %v266
      %1468 = vmatprep.subr.mxu0 0.0
      %1469 = vmatpush1.msra.mxu0 0.0
      %1470 = vmatprep.subr.mxu0 0.0
      %1471 = vmatpush1.msra.mxu0 0.0
      %1472 = vmatprep.subr.mxu0 0.0
      %1473 = vmatpush1.msra.mxu0 0.0
      %1474 = vmatprep.subr.mxu0 0.0
      %1475 = vmatpush1.msra.mxu0 0.0
      %1476 = vmatprep.subr.mxu0 0.0
      %1477 = vmatpush1.msra.mxu0 0.0
      %1478 = vmatprep.subr.mxu0 0.0
      %1479 = vmatpush1.msra.mxu0 0.0
      %1480 = vmatprep.subr.mxu0 0.0
      %1481 = vmatpush1.msra.mxu0 0.0
      %1482 = vmatprep.subr.mxu0 0.0
      %1483 = vmatpush1.msra.mxu0 0.0
      %1484 = vmatprep.subr.mxu0 0.0
      %1485 = vmatpush1.msra.mxu0 0.0
      %1486 = vmatprep.subr.mxu0 0.0
      %1487 = vmatpush1.msra.mxu0 0.0
      %1488 = vmatprep.subr.mxu0 0.0
      %1489 = vmatpush1.msra.mxu0 0.0
      %1490 = vmatprep.subr.mxu0 0.0
      %1491 = vmatpush1.msra.mxu0 0.0
      %1492 = vmatprep.subr.mxu0 0.0
      %1493 = vmatpush1.msra.mxu0 0.0
      %1494 = vmatprep.subr.mxu0 0.0
      %1495 = vmatpush1.msra.mxu0 0.0
      %1496 = vmatprep.subr.mxu0 0.0
      %1497 = vmatpush1.msra.mxu0 0.0
      %1498 = vmatprep.subr.mxu0 0.0
      %1499 = vmatpush1.msra.mxu0 0.0
      %1500 = vmatprep.mubr.f32.mxu0 0.0
      %1501 = vmatmul.mubr.f32.gmra.mrb[0].mxu0 %v1333
      %v1502 = vpop.f32.mrb[0].mxu0
      %v1503 = vadd.f32 0.0, %v1502
      %v1504 = vpop.f32.mrb[0].mxu0
      %v1505 = vadd.f32 0.0, %v1504
      %1506 = vmatprep.mubr.f32.mxu0 0.0
      %1507 = vmatmul.mubr.f32.gmra.mrb[0].mxu0 %v1334
      %v1508 = vpop.f32.mrb[0].mxu0
      %v1509 = vadd.f32 0.0, %v1508
      %v1510 = vpop.f32.mrb[0].mxu0
      %v1511 = vadd.f32 0.0, %v1510
      %1512 = vmatprep.mubr.f32.mxu0 0.0
      %1513 = vmatmul.mubr.f32.gmra.mrb[0].mxu0 %v1335
      %v1514 = vpop.f32.mrb[0].mxu0
      %v1515 = vadd.f32 0.0, %v1514
      %v1516 = vpop.f32.mrb[0].mxu0
      %v1517 = vadd.f32 0.0, %v1516
      %1518 = vdwg.mxu0
      %v1519 = vadd.f32 %v1341, %v1420
      %v1520 = vadd.f32 %v1342, %v1422
      %v1521 = vadd.f32 %v1343, %v1503
      %v1522 = vadd.f32 %v1344, %v1505
      %v1523 = vadd.f32 %v1345, %v1426
      %v1524 = vadd.f32 %v1346, %v1428
      %v1525 = vadd.f32 %v1347, %v1509
      %v1526 = vadd.f32 %v1348, %v1511
      %v1527 = vadd.f32 %v1349, %v1432
      %v1528 = vadd.f32 %v1350, %v1434
      %v1529 = vadd.f32 %v1351, %v1515
      %v1530 = vadd.f32 %v1352, %v1517
      %v1531 = vxor.u32 %v1519, 2147483648
      %v1532 = vxor.u32 %v1523, 2147483648
      %v1533 = vxor.u32 %v1527, 2147483648
      %v1534 = vmul.f32 %v1531, 1.442695
      %v1535 = vpow.pop %v1534
      %v1536 = vmul.f32 %v1532, 1.442695
      %v1537 = vpow.pop %v1536
      %v1538 = vmul.f32 %v1533, 1.442695
      %v1539 = vpow.pop %v1538
      %v1540 = vadd.f32 %v1535, 1.0
      %v1541 = vadd.f32 %v1537, 1.0
      %v1542 = vadd.f32 %v1539, 1.0
      %v1543 = vrcp.pop %v1540
      %v1544 = vmul.f32 1.0, %v1543
      %v1545 = vrcp.pop %v1541
      %v1546 = vmul.f32 1.0, %v1545
      %v1547 = vrcp.pop %v1542
      %v1548 = vmul.f32 1.0, %v1547
      %v1549 = vxor.u32 %v1520, 2147483648
      %v1550 = vxor.u32 %v1524, 2147483648
      %v1551 = vxor.u32 %v1528, 2147483648
      %v1552 = vmul.f32 %v1549, 1.442695
      %v1553 = vpow.pop %v1552
      %v1554 = vmul.f32 %v1550, 1.442695
      %v1555 = vpow.pop %v1554
      %v1556 = vmul.f32 %v1551, 1.442695
      %v1557 = vpow.pop %v1556
      %v1558 = vadd.f32 %v1553, 1.0
      %v1559 = vadd.f32 %v1555, 1.0
      %v1560 = vadd.f32 %v1557, 1.0
      %v1561 = vrcp.pop %v1558
      %v1562 = vmul.f32 1.0, %v1561
      %v1563 = vrcp.pop %v1559
      %v1564 = vmul.f32 1.0, %v1563
      %v1565 = vrcp.pop %v1560
      %v1566 = vmul.f32 1.0, %v1565
      %v1567 = vtanh.pop %v1521
      %v1568 = vtanh.pop %v1525
      %v1569 = vtanh.pop %v1529
      %v1570 = vxor.u32 %v1522, 2147483648
      %v1571 = vxor.u32 %v1526, 2147483648
      %v1572 = vxor.u32 %v1530, 2147483648
      %v1573 = vmul.f32 %v1570, 1.442695
      %v1574 = vpow.pop %v1573
      %v1575 = vmul.f32 %v1571, 1.442695
      %v1576 = vpow.pop %v1575
      %v1577 = vmul.f32 %v1572, 1.442695
      %v1578 = vpow.pop %v1577
      %v1579 = vadd.f32 %v1574, 1.0
      %v1580 = vadd.f32 %v1576, 1.0
      %v1581 = vadd.f32 %v1578, 1.0
      %v1582 = vrcp.pop %v1579
      %v1583 = vmul.f32 1.0, %v1582
      %v1584 = vrcp.pop %v1580
      %v1585 = vmul.f32 1.0, %v1584
      %v1586 = vrcp.pop %v1581
      %v1587 = vmul.f32 1.0, %v1586
      %v1588 = vmul.f32 %v1562, %v1327
      %v1589 = vmul.f32 %v1564, %v1328
      %v1590 = vmul.f32 %v1566, %v1329
      %v1591 = vmul.f32 %v1544, %v1567
      %v1592 = vmul.f32 %v1546, %v1568
      %v1593 = vmul.f32 %v1548, %v1569
      %v1594 = vadd.f32 %v1588, %v1591
      %v1595 = vadd.f32 %v1589, %v1592
      %v1596 = vadd.f32 %v1590, %v1593
      %v1597 = vtanh.pop %v1594
      %v1598 = vtanh.pop %v1595
      %v1599 = vtanh.pop %v1596
      %v1600 = vmul.f32 %v1583, %v1597
      %v1601 = vmul.f32 %v1585, %v1598
      %v1602 = vmul.f32 %v1587, %v1599
      %s1603 = scalar_lea.vmem %s191, 96
      %1604 = vst [vmem:[%s1603] sm:$0xff] %v1600
      %1605 = vst [vmem:[%s1603 + $0x8] sm:$0xff] %v1601
      %1606 = vst [vmem:[%s1603 + $0x10] sm:$0xff] %v1602
      %s1607 = scalar_lea.vmem %s179, 480
      %v1608 = vld [vmem:[%s1607] sm:$0xff]
      %v1609 = vld [vmem:[%s1607 + $0x8] sm:$0xff]
      %v1610 = vld [vmem:[%s1607 + $0x10] sm:$0xff]
      %v1611 = vld [vmem:[%s1607 + $0x18] sm:$0xff]
      %v1612 = vld [vmem:[%s1607 + $0x20] sm:$0xff]
      %v1613 = vld [vmem:[%s1607 + $0x28] sm:$0xff]
      %v1614 = vld [vmem:[%s1607 + $0x30] sm:$0xff]
      %v1615 = vld [vmem:[%s1607 + $0x38] sm:$0xff]
      %v1616 = vld [vmem:[%s1607 + $0x40] sm:$0xff]
      %v1617 = vld [vmem:[%s1607 + $0x48] sm:$0xff]
      %v1618 = vld [vmem:[%s1607 + $0x50] sm:$0xff]
      %v1619 = vld [vmem:[%s1607 + $0x58] sm:$0xff]
      %1620 = vmatprep.subr.mxu0 %v205
      %1621 = vmatpush1.msra.mxu0 %v204
      %1622 = vmatprep.subr.mxu0 %v209
      %1623 = vmatpush1.msra.mxu0 %v208
      %1624 = vmatprep.subr.mxu0 %v213
      %1625 = vmatpush1.msra.mxu0 %v212
      %1626 = vmatprep.subr.mxu0 %v217
      %1627 = vmatpush1.msra.mxu0 %v216
      %1628 = vmatprep.subr.mxu0 %v221
      %1629 = vmatpush1.msra.mxu0 %v220
      %1630 = vmatprep.subr.mxu0 %v225
      %1631 = vmatpush1.msra.mxu0 %v224
      %1632 = vmatprep.subr.mxu0 %v229
      %1633 = vmatpush1.msra.mxu0 %v228
      %1634 = vmatprep.subr.mxu0 %v233
      %1635 = vmatpush1.msra.mxu0 %v232
      %1636 = vmatprep.subr.mxu0 %v237
      %1637 = vmatpush1.msra.mxu0 %v236
      %1638 = vmatprep.subr.mxu0 %v241
      %1639 = vmatpush1.msra.mxu0 %v240
      %1640 = vmatprep.subr.mxu0 %v245
      %1641 = vmatpush1.msra.mxu0 %v244
      %1642 = vmatprep.subr.mxu0 %v249
      %1643 = vmatpush1.msra.mxu0 %v248
      %1644 = vmatprep.subr.mxu0 %v253
      %1645 = vmatpush1.msra.mxu0 %v252
      %1646 = vmatprep.subr.mxu0 %v257
      %1647 = vmatpush1.msra.mxu0 %v256
      %1648 = vmatprep.subr.mxu0 %v261
      %1649 = vmatpush1.msra.mxu0 %v260
      %1650 = vmatprep.subr.mxu0 %v265
      %1651 = vmatpush1.msra.mxu0 %v264
      %1652 = vmatprep.subr.mxu0 0.0
      %1653 = vmatpush1.msra.mxu0 0.0
      %1654 = vmatprep.subr.mxu0 0.0
      %1655 = vmatpush1.msra.mxu0 0.0
      %1656 = vmatprep.subr.mxu0 0.0
      %1657 = vmatpush1.msra.mxu0 0.0
      %1658 = vmatprep.subr.mxu0 0.0
      %1659 = vmatpush1.msra.mxu0 0.0
      %1660 = vmatprep.subr.mxu0 0.0
      %1661 = vmatpush1.msra.mxu0 0.0
      %1662 = vmatprep.subr.mxu0 0.0
      %1663 = vmatpush1.msra.mxu0 0.0
      %1664 = vmatprep.subr.mxu0 0.0
      %1665 = vmatpush1.msra.mxu0 0.0
      %1666 = vmatprep.subr.mxu0 0.0
      %1667 = vmatpush1.msra.mxu0 0.0
      %1668 = vmatprep.subr.mxu0 0.0
      %1669 = vmatpush1.msra.mxu0 0.0
      %1670 = vmatprep.subr.mxu0 0.0
      %1671 = vmatpush1.msra.mxu0 0.0
      %1672 = vmatprep.subr.mxu0 0.0
      %1673 = vmatpush1.msra.mxu0 0.0
      %1674 = vmatprep.subr.mxu0 0.0
      %1675 = vmatpush1.msra.mxu0 0.0
      %1676 = vmatprep.subr.mxu0 0.0
      %1677 = vmatpush1.msra.mxu0 0.0
      %1678 = vmatprep.subr.mxu0 0.0
      %1679 = vmatpush1.msra.mxu0 0.0
      %1680 = vmatprep.subr.mxu0 0.0
      %1681 = vmatpush1.msra.mxu0 0.0
      %1682 = vmatprep.subr.mxu0 0.0
      %1683 = vmatpush1.msra.mxu0 0.0
      %1684 = vmatprep.mubr.f32.mxu0 0.0
      %1685 = vmatmul.mubr.f32.gmra.mrb[0].mxu0 %v1600
      %v1686 = vpop.f32.mrb[0].mxu0
      %v1687 = vadd.f32 0.0, %v1686
      %v1688 = vpop.f32.mrb[0].mxu0
      %v1689 = vadd.f32 0.0, %v1688
      %1690 = vmatprep.mubr.f32.mxu0 0.0
      %1691 = vmatmul.mubr.f32.gmra.mrb[0].mxu0 %v1601
      %v1692 = vpop.f32.mrb[0].mxu0
      %v1693 = vadd.f32 0.0, %v1692
      %v1694 = vpop.f32.mrb[0].mxu0
      %v1695 = vadd.f32 0.0, %v1694
      %1696 = vmatprep.mubr.f32.mxu0 0.0
      %1697 = vmatmul.mubr.f32.gmra.mrb[0].mxu0 %v1602
      %v1698 = vpop.f32.mrb[0].mxu0
      %v1699 = vadd.f32 0.0, %v1698
      %v1700 = vpop.f32.mrb[0].mxu0
      %v1701 = vadd.f32 0.0, %v1700
      %1702 = vdwg.mxu0
      %1703 = vmatprep.subr.mxu0 %v207
      %1704 = vmatpush1.msra.mxu0 %v206
      %1705 = vmatprep.subr.mxu0 %v211
      %1706 = vmatpush1.msra.mxu0 %v210
      %1707 = vmatprep.subr.mxu0 %v215
      %1708 = vmatpush1.msra.mxu0 %v214
      %1709 = vmatprep.subr.mxu0 %v219
      %1710 = vmatpush1.msra.mxu0 %v218
      %1711 = vmatprep.subr.mxu0 %v223
      %1712 = vmatpush1.msra.mxu0 %v222
      %1713 = vmatprep.subr.mxu0 %v227
      %1714 = vmatpush1.msra.mxu0 %v226
      %1715 = vmatprep.subr.mxu0 %v231
      %1716 = vmatpush1.msra.mxu0 %v230
      %1717 = vmatprep.subr.mxu0 %v235
      %1718 = vmatpush1.msra.mxu0 %v234
      %1719 = vmatprep.subr.mxu0 %v239
      %1720 = vmatpush1.msra.mxu0 %v238
      %1721 = vmatprep.subr.mxu0 %v243
      %1722 = vmatpush1.msra.mxu0 %v242
      %1723 = vmatprep.subr.mxu0 %v247
      %1724 = vmatpush1.msra.mxu0 %v246
      %1725 = vmatprep.subr.mxu0 %v251
      %1726 = vmatpush1.msra.mxu0 %v250
      %1727 = vmatprep.subr.mxu0 %v255
      %1728 = vmatpush1.msra.mxu0 %v254
      %1729 = vmatprep.subr.mxu0 %v259
      %1730 = vmatpush1.msra.mxu0 %v258
      %1731 = vmatprep.subr.mxu0 %v263
      %1732 = vmatpush1.msra.mxu0 %v262
      %1733 = vmatprep.subr.mxu0 %v267
      %1734 = vmatpush1.msra.mxu0 %v266
      %1735 = vmatprep.subr.mxu0 0.0
      %1736 = vmatpush1.msra.mxu0 0.0
      %1737 = vmatprep.subr.mxu0 0.0
      %1738 = vmatpush1.msra.mxu0 0.0
      %1739 = vmatprep.subr.mxu0 0.0
      %1740 = vmatpush1.msra.mxu0 0.0
      %1741 = vmatprep.subr.mxu0 0.0
      %1742 = vmatpush1.msra.mxu0 0.0
      %1743 = vmatprep.subr.mxu0 0.0
      %1744 = vmatpush1.msra.mxu0 0.0
      %1745 = vmatprep.subr.mxu0 0.0
      %1746 = vmatpush1.msra.mxu0 0.0
      %1747 = vmatprep.subr.mxu0 0.0
      %1748 = vmatpush1.msra.mxu0 0.0
      %1749 = vmatprep.subr.mxu0 0.0
      %1750 = vmatpush1.msra.mxu0 0.0
      %1751 = vmatprep.subr.mxu0 0.0
      %1752 = vmatpush1.msra.mxu0 0.0
      %1753 = vmatprep.subr.mxu0 0.0
      %1754 = vmatpush1.msra.mxu0 0.0
      %1755 = vmatprep.subr.mxu0 0.0
      %1756 = vmatpush1.msra.mxu0 0.0
      %1757 = vmatprep.subr.mxu0 0.0
      %1758 = vmatpush1.msra.mxu0 0.0
      %1759 = vmatprep.subr.mxu0 0.0
      %1760 = vmatpush1.msra.mxu0 0.0
      %1761 = vmatprep.subr.mxu0 0.0
      %1762 = vmatpush1.msra.mxu0 0.0
      %1763 = vmatprep.subr.mxu0 0.0
      %1764 = vmatpush1.msra.mxu0 0.0
      %1765 = vmatprep.subr.mxu0 0.0
      %1766 = vmatpush1.msra.mxu0 0.0
      %1767 = vmatprep.mubr.f32.mxu0 0.0
      %1768 = vmatmul.mubr.f32.gmra.mrb[0].mxu0 %v1600
      %v1769 = vpop.f32.mrb[0].mxu0
      %v1770 = vadd.f32 0.0, %v1769
      %v1771 = vpop.f32.mrb[0].mxu0
      %v1772 = vadd.f32 0.0, %v1771
      %1773 = vmatprep.mubr.f32.mxu0 0.0
      %1774 = vmatmul.mubr.f32.gmra.mrb[0].mxu0 %v1601
      %v1775 = vpop.f32.mrb[0].mxu0
      %v1776 = vadd.f32 0.0, %v1775
      %v1777 = vpop.f32.mrb[0].mxu0
      %v1778 = vadd.f32 0.0, %v1777
      %1779 = vmatprep.mubr.f32.mxu0 0.0
      %1780 = vmatmul.mubr.f32.gmra.mrb[0].mxu0 %v1602
      %v1781 = vpop.f32.mrb[0].mxu0
      %v1782 = vadd.f32 0.0, %v1781
      %v1783 = vpop.f32.mrb[0].mxu0
      %v1784 = vadd.f32 0.0, %v1783
      %1785 = vdwg.mxu0
      %v1786 = vadd.f32 %v1608, %v1687
      %v1787 = vadd.f32 %v1609, %v1689
      %v1788 = vadd.f32 %v1610, %v1770
      %v1789 = vadd.f32 %v1611, %v1772
      %v1790 = vadd.f32 %v1612, %v1693
      %v1791 = vadd.f32 %v1613, %v1695
      %v1792 = vadd.f32 %v1614, %v1776
      %v1793 = vadd.f32 %v1615, %v1778
      %v1794 = vadd.f32 %v1616, %v1699
      %v1795 = vadd.f32 %v1617, %v1701
      %v1796 = vadd.f32 %v1618, %v1782
      %v1797 = vadd.f32 %v1619, %v1784
      %v1798 = vxor.u32 %v1786, 2147483648
      %v1799 = vxor.u32 %v1790, 2147483648
      %v1800 = vxor.u32 %v1794, 2147483648
      %v1801 = vmul.f32 %v1798, 1.442695
      %v1802 = vpow.pop %v1801
      %v1803 = vmul.f32 %v1799, 1.442695
      %v1804 = vpow.pop %v1803
      %v1805 = vmul.f32 %v1800, 1.442695
      %v1806 = vpow.pop %v1805
      %v1807 = vadd.f32 %v1802, 1.0
      %v1808 = vadd.f32 %v1804, 1.0
      %v1809 = vadd.f32 %v1806, 1.0
      %v1810 = vrcp.pop %v1807
      %v1811 = vmul.f32 1.0, %v1810
      %v1812 = vrcp.pop %v1808
      %v1813 = vmul.f32 1.0, %v1812
      %v1814 = vrcp.pop %v1809
      %v1815 = vmul.f32 1.0, %v1814
      %v1816 = vxor.u32 %v1787, 2147483648
      %v1817 = vxor.u32 %v1791, 2147483648
      %v1818 = vxor.u32 %v1795, 2147483648
      %v1819 = vmul.f32 %v1816, 1.442695
      %v1820 = vpow.pop %v1819
      %v1821 = vmul.f32 %v1817, 1.442695
      %v1822 = vpow.pop %v1821
      %v1823 = vmul.f32 %v1818, 1.442695
      %v1824 = vpow.pop %v1823
      %v1825 = vadd.f32 %v1820, 1.0
      %v1826 = vadd.f32 %v1822, 1.0
      %v1827 = vadd.f32 %v1824, 1.0
      %v1828 = vrcp.pop %v1825
      %v1829 = vmul.f32 1.0, %v1828
      %v1830 = vrcp.pop %v1826
      %v1831 = vmul.f32 1.0, %v1830
      %v1832 = vrcp.pop %v1827
      %v1833 = vmul.f32 1.0, %v1832
      %v1834 = vtanh.pop %v1788
      %v1835 = vtanh.pop %v1792
      %v1836 = vtanh.pop %v1796
      %v1837 = vxor.u32 %v1789, 2147483648
      %v1838 = vxor.u32 %v1793, 2147483648
      %v1839 = vxor.u32 %v1797, 2147483648
      %v1840 = vmul.f32 %v1837, 1.442695
      %v1841 = vpow.pop %v1840
      %v1842 = vmul.f32 %v1838, 1.442695
      %v1843 = vpow.pop %v1842
      %v1844 = vmul.f32 %v1839, 1.442695
      %v1845 = vpow.pop %v1844
      %v1846 = vadd.f32 %v1841, 1.0
      %v1847 = vadd.f32 %v1843, 1.0
      %v1848 = vadd.f32 %v1845, 1.0
      %v1849 = vrcp.pop %v1846
      %v1850 = vmul.f32 1.0, %v1849
      %v1851 = vrcp.pop %v1847
      %v1852 = vmul.f32 1.0, %v1851
      %v1853 = vrcp.pop %v1848
      %v1854 = vmul.f32 1.0, %v1853
      %v1855 = vmul.f32 %v1829, %v1594
      %v1856 = vmul.f32 %v1831, %v1595
      %v1857 = vmul.f32 %v1833, %v1596
      %v1858 = vmul.f32 %v1811, %v1834
      %v1859 = vmul.f32 %v1813, %v1835
      %v1860 = vmul.f32 %v1815, %v1836
      %v1861 = vadd.f32 %v1855, %v1858
      %v1862 = vadd.f32 %v1856, %v1859
      %v1863 = vadd.f32 %v1857, %v1860
      %v1864 = vtanh.pop %v1861
      %v1865 = vtanh.pop %v1862
      %v1866 = vtanh.pop %v1863
      %v1867 = vmul.f32 %v1850, %v1864
      %v1868 = vmul.f32 %v1852, %v1865
      %v1869 = vmul.f32 %v1854, %v1866
      %s1870 = scalar_lea.vmem %s191, 120
      %1871 = vst [vmem:[%s1870] sm:$0xff] %v1867
      %1872 = vst [vmem:[%s1870 + $0x8] sm:$0xff] %v1868
      %1873 = vst [vmem:[%s1870 + $0x10] sm:$0xff] %v1869
      %s1874 = scalar_lea.vmem %s179, 576
      %v1875 = vld [vmem:[%s1874] sm:$0xff]
      %v1876 = vld [vmem:[%s1874 + $0x8] sm:$0xff]
      %v1877 = vld [vmem:[%s1874 + $0x10] sm:$0xff]
      %v1878 = vld [vmem:[%s1874 + $0x18] sm:$0xff]
      %v1879 = vld [vmem:[%s1874 + $0x20] sm:$0xff]
      %v1880 = vld [vmem:[%s1874 + $0x28] sm:$0xff]
      %v1881 = vld [vmem:[%s1874 + $0x30] sm:$0xff]
      %v1882 = vld [vmem:[%s1874 + $0x38] sm:$0xff]
      %v1883 = vld [vmem:[%s1874 + $0x40] sm:$0xff]
      %v1884 = vld [vmem:[%s1874 + $0x48] sm:$0xff]
      %v1885 = vld [vmem:[%s1874 + $0x50] sm:$0xff]
      %v1886 = vld [vmem:[%s1874 + $0x58] sm:$0xff]
      %1887 = vmatprep.subr.mxu0 %v205
      %1888 = vmatpush1.msra.mxu0 %v204
      %1889 = vmatprep.subr.mxu0 %v209
      %1890 = vmatpush1.msra.mxu0 %v208
      %1891 = vmatprep.subr.mxu0 %v213
      %1892 = vmatpush1.msra.mxu0 %v212
      %1893 = vmatprep.subr.mxu0 %v217
      %1894 = vmatpush1.msra.mxu0 %v216
      %1895 = vmatprep.subr.mxu0 %v221
      %1896 = vmatpush1.msra.mxu0 %v220
      %1897 = vmatprep.subr.mxu0 %v225
      %1898 = vmatpush1.msra.mxu0 %v224
      %1899 = vmatprep.subr.mxu0 %v229
      %1900 = vmatpush1.msra.mxu0 %v228
      %1901 = vmatprep.subr.mxu0 %v233
      %1902 = vmatpush1.msra.mxu0 %v232
      %1903 = vmatprep.subr.mxu0 %v237
      %1904 = vmatpush1.msra.mxu0 %v236
      %1905 = vmatprep.subr.mxu0 %v241
      %1906 = vmatpush1.msra.mxu0 %v240
      %1907 = vmatprep.subr.mxu0 %v245
      %1908 = vmatpush1.msra.mxu0 %v244
      %1909 = vmatprep.subr.mxu0 %v249
      %1910 = vmatpush1.msra.mxu0 %v248
      %1911 = vmatprep.subr.mxu0 %v253
      %1912 = vmatpush1.msra.mxu0 %v252
      %1913 = vmatprep.subr.mxu0 %v257
      %1914 = vmatpush1.msra.mxu0 %v256
      %1915 = vmatprep.subr.mxu0 %v261
      %1916 = vmatpush1.msra.mxu0 %v260
      %1917 = vmatprep.subr.mxu0 %v265
      %1918 = vmatpush1.msra.mxu0 %v264
      %1919 = vmatprep.subr.mxu0 0.0
      %1920 = vmatpush1.msra.mxu0 0.0
      %1921 = vmatprep.subr.mxu0 0.0
      %1922 = vmatpush1.msra.mxu0 0.0
      %1923 = vmatprep.subr.mxu0 0.0
      %1924 = vmatpush1.msra.mxu0 0.0
      %1925 = vmatprep.subr.mxu0 0.0
      %1926 = vmatpush1.msra.mxu0 0.0
      %1927 = vmatprep.subr.mxu0 0.0
      %1928 = vmatpush1.msra.mxu0 0.0
      %1929 = vmatprep.subr.mxu0 0.0
      %1930 = vmatpush1.msra.mxu0 0.0
      %1931 = vmatprep.subr.mxu0 0.0
      %1932 = vmatpush1.msra.mxu0 0.0
      %1933 = vmatprep.subr.mxu0 0.0
      %1934 = vmatpush1.msra.mxu0 0.0
      %1935 = vmatprep.subr.mxu0 0.0
      %1936 = vmatpush1.msra.mxu0 0.0
      %1937 = vmatprep.subr.mxu0 0.0
      %1938 = vmatpush1.msra.mxu0 0.0
      %1939 = vmatprep.subr.mxu0 0.0
      %1940 = vmatpush1.msra.mxu0 0.0
      %1941 = vmatprep.subr.mxu0 0.0
      %1942 = vmatpush1.msra.mxu0 0.0
      %1943 = vmatprep.subr.mxu0 0.0
      %1944 = vmatpush1.msra.mxu0 0.0
      %1945 = vmatprep.subr.mxu0 0.0
      %1946 = vmatpush1.msra.mxu0 0.0
      %1947 = vmatprep.subr.mxu0 0.0
      %1948 = vmatpush1.msra.mxu0 0.0
      %1949 = vmatprep.subr.mxu0 0.0
      %1950 = vmatpush1.msra.mxu0 0.0
      %1951 = vmatprep.mubr.f32.mxu0 0.0
      %1952 = vmatmul.mubr.f32.gmra.mrb[0].mxu0 %v1867
      %v1953 = vpop.f32.mrb[0].mxu0
      %v1954 = vadd.f32 0.0, %v1953
      %v1955 = vpop.f32.mrb[0].mxu0
      %v1956 = vadd.f32 0.0, %v1955
      %1957 = vmatprep.mubr.f32.mxu0 0.0
      %1958 = vmatmul.mubr.f32.gmra.mrb[0].mxu0 %v1868
      %v1959 = vpop.f32.mrb[0].mxu0
      %v1960 = vadd.f32 0.0, %v1959
      %v1961 = vpop.f32.mrb[0].mxu0
      %v1962 = vadd.f32 0.0, %v1961
      %1963 = vmatprep.mubr.f32.mxu0 0.0
      %1964 = vmatmul.mubr.f32.gmra.mrb[0].mxu0 %v1869
      %v1965 = vpop.f32.mrb[0].mxu0
      %v1966 = vadd.f32 0.0, %v1965
      %v1967 = vpop.f32.mrb[0].mxu0
      %v1968 = vadd.f32 0.0, %v1967
      %1969 = vdwg.mxu0
      %1970 = vmatprep.subr.mxu0 %v207
      %1971 = vmatpush1.msra.mxu0 %v206
      %1972 = vmatprep.subr.mxu0 %v211
      %1973 = vmatpush1.msra.mxu0 %v210
      %1974 = vmatprep.subr.mxu0 %v215
      %1975 = vmatpush1.msra.mxu0 %v214
      %1976 = vmatprep.subr.mxu0 %v219
      %1977 = vmatpush1.msra.mxu0 %v218
      %1978 = vmatprep.subr.mxu0 %v223
      %1979 = vmatpush1.msra.mxu0 %v222
      %1980 = vmatprep.subr.mxu0 %v227
      %1981 = vmatpush1.msra.mxu0 %v226
      %1982 = vmatprep.subr.mxu0 %v231
      %1983 = vmatpush1.msra.mxu0 %v230
      %1984 = vmatprep.subr.mxu0 %v235
      %1985 = vmatpush1.msra.mxu0 %v234
      %1986 = vmatprep.subr.mxu0 %v239
      %1987 = vmatpush1.msra.mxu0 %v238
      %1988 = vmatprep.subr.mxu0 %v243
      %1989 = vmatpush1.msra.mxu0 %v242
      %1990 = vmatprep.subr.mxu0 %v247
      %1991 = vmatpush1.msra.mxu0 %v246
      %1992 = vmatprep.subr.mxu0 %v251
      %1993 = vmatpush1.msra.mxu0 %v250
      %1994 = vmatprep.subr.mxu0 %v255
      %1995 = vmatpush1.msra.mxu0 %v254
      %1996 = vmatprep.subr.mxu0 %v259
      %1997 = vmatpush1.msra.mxu0 %v258
      %1998 = vmatprep.subr.mxu0 %v263
      %1999 = vmatpush1.msra.mxu0 %v262
      %2000 = vmatprep.subr.mxu0 %v267
      %2001 = vmatpush1.msra.mxu0 %v266
      %2002 = vmatprep.subr.mxu0 0.0
      %2003 = vmatpush1.msra.mxu0 0.0
      %2004 = vmatprep.subr.mxu0 0.0
      %2005 = vmatpush1.msra.mxu0 0.0
      %2006 = vmatprep.subr.mxu0 0.0
      %2007 = vmatpush1.msra.mxu0 0.0
      %2008 = vmatprep.subr.mxu0 0.0
      %2009 = vmatpush1.msra.mxu0 0.0
      %2010 = vmatprep.subr.mxu0 0.0
      %2011 = vmatpush1.msra.mxu0 0.0
      %2012 = vmatprep.subr.mxu0 0.0
      %2013 = vmatpush1.msra.mxu0 0.0
      %2014 = vmatprep.subr.mxu0 0.0
      %2015 = vmatpush1.msra.mxu0 0.0
      %2016 = vmatprep.subr.mxu0 0.0
      %2017 = vmatpush1.msra.mxu0 0.0
      %2018 = vmatprep.subr.mxu0 0.0
      %2019 = vmatpush1.msra.mxu0 0.0
      %2020 = vmatprep.subr.mxu0 0.0
      %2021 = vmatpush1.msra.mxu0 0.0
      %2022 = vmatprep.subr.mxu0 0.0
      %2023 = vmatpush1.msra.mxu0 0.0
      %2024 = vmatprep.subr.mxu0 0.0
      %2025 = vmatpush1.msra.mxu0 0.0
      %2026 = vmatprep.subr.mxu0 0.0
      %2027 = vmatpush1.msra.mxu0 0.0
      %2028 = vmatprep.subr.mxu0 0.0
      %2029 = vmatpush1.msra.mxu0 0.0
      %2030 = vmatprep.subr.mxu0 0.0
      %2031 = vmatpush1.msra.mxu0 0.0
      %2032 = vmatprep.subr.mxu0 0.0
      %2033 = vmatpush1.msra.mxu0 0.0
      %2034 = vmatprep.mubr.f32.mxu0 0.0
      %2035 = vmatmul.mubr.f32.gmra.mrb[0].mxu0 %v1867
      %v2036 = vpop.f32.mrb[0].mxu0
      %v2037 = vadd.f32 0.0, %v2036
      %v2038 = vpop.f32.mrb[0].mxu0
      %v2039 = vadd.f32 0.0, %v2038
      %2040 = vmatprep.mubr.f32.mxu0 0.0
      %2041 = vmatmul.mubr.f32.gmra.mrb[0].mxu0 %v1868
      %v2042 = vpop.f32.mrb[0].mxu0
      %v2043 = vadd.f32 0.0, %v2042
      %v2044 = vpop.f32.mrb[0].mxu0
      %v2045 = vadd.f32 0.0, %v2044
      %2046 = vmatprep.mubr.f32.mxu0 0.0
      %2047 = vmatmul.mubr.f32.gmra.mrb[0].mxu0 %v1869
      %v2048 = vpop.f32.mrb[0].mxu0
      %v2049 = vadd.f32 0.0, %v2048
      %v2050 = vpop.f32.mrb[0].mxu0
      %v2051 = vadd.f32 0.0, %v2050
      %2052 = vdwg.mxu0
      %v2053 = vadd.f32 %v1875, %v1954
      %v2054 = vadd.f32 %v1876, %v1956
      %v2055 = vadd.f32 %v1877, %v2037
      %v2056 = vadd.f32 %v1878, %v2039
      %v2057 = vadd.f32 %v1879, %v1960
      %v2058 = vadd.f32 %v1880, %v1962
      %v2059 = vadd.f32 %v1881, %v2043
      %v2060 = vadd.f32 %v1882, %v2045
      %v2061 = vadd.f32 %v1883, %v1966
      %v2062 = vadd.f32 %v1884, %v1968
      %v2063 = vadd.f32 %v1885, %v2049
      %v2064 = vadd.f32 %v1886, %v2051
      %v2065 = vxor.u32 %v2053, 2147483648
      %v2066 = vxor.u32 %v2057, 2147483648
      %v2067 = vxor.u32 %v2061, 2147483648
      %v2068 = vmul.f32 %v2065, 1.442695
      %v2069 = vpow.pop %v2068
      %v2070 = vmul.f32 %v2066, 1.442695
      %v2071 = vpow.pop %v2070
      %v2072 = vmul.f32 %v2067, 1.442695
      %v2073 = vpow.pop %v2072
      %v2074 = vadd.f32 %v2069, 1.0
      %v2075 = vadd.f32 %v2071, 1.0
      %v2076 = vadd.f32 %v2073, 1.0
      %v2077 = vrcp.pop %v2074
      %v2078 = vmul.f32 1.0, %v2077
      %v2079 = vrcp.pop %v2075
      %v2080 = vmul.f32 1.0, %v2079
      %v2081 = vrcp.pop %v2076
      %v2082 = vmul.f32 1.0, %v2081
      %v2083 = vxor.u32 %v2054, 2147483648
      %v2084 = vxor.u32 %v2058, 2147483648
      %v2085 = vxor.u32 %v2062, 2147483648
      %v2086 = vmul.f32 %v2083, 1.442695
      %v2087 = vpow.pop %v2086
      %v2088 = vmul.f32 %v2084, 1.442695
      %v2089 = vpow.pop %v2088
      %v2090 = vmul.f32 %v2085, 1.442695
      %v2091 = vpow.pop %v2090
      %v2092 = vadd.f32 %v2087, 1.0
      %v2093 = vadd.f32 %v2089, 1.0
      %v2094 = vadd.f32 %v2091, 1.0
      %v2095 = vrcp.pop %v2092
      %v2096 = vmul.f32 1.0, %v2095
      %v2097 = vrcp.pop %v2093
      %v2098 = vmul.f32 1.0, %v2097
      %v2099 = vrcp.pop %v2094
      %v2100 = vmul.f32 1.0, %v2099
      %v2101 = vtanh.pop %v2055
      %v2102 = vtanh.pop %v2059
      %v2103 = vtanh.pop %v2063
      %v2104 = vxor.u32 %v2056, 2147483648
      %v2105 = vxor.u32 %v2060, 2147483648
      %v2106 = vxor.u32 %v2064, 2147483648
      %v2107 = vmul.f32 %v2104, 1.442695
      %v2108 = vpow.pop %v2107
      %v2109 = vmul.f32 %v2105, 1.442695
      %v2110 = vpow.pop %v2109
      %v2111 = vmul.f32 %v2106, 1.442695
      %v2112 = vpow.pop %v2111
      %v2113 = vadd.f32 %v2108, 1.0
      %v2114 = vadd.f32 %v2110, 1.0
      %v2115 = vadd.f32 %v2112, 1.0
      %v2116 = vrcp.pop %v2113
      %v2117 = vmul.f32 1.0, %v2116
      %v2118 = vrcp.pop %v2114
      %v2119 = vmul.f32 1.0, %v2118
      %v2120 = vrcp.pop %v2115
      %v2121 = vmul.f32 1.0, %v2120
      %v2122 = vmul.f32 %v2096, %v1861
      %v2123 = vmul.f32 %v2098, %v1862
      %v2124 = vmul.f32 %v2100, %v1863
      %v2125 = vmul.f32 %v2078, %v2101
      %v2126 = vmul.f32 %v2080, %v2102
      %v2127 = vmul.f32 %v2082, %v2103
      %v2128 = vadd.f32 %v2122, %v2125
      %v2129 = vadd.f32 %v2123, %v2126
      %v2130 = vadd.f32 %v2124, %v2127
      %v2131 = vtanh.pop %v2128
      %v2132 = vtanh.pop %v2129
      %v2133 = vtanh.pop %v2130
      %v2134 = vmul.f32 %v2117, %v2131
      %v2135 = vmul.f32 %v2119, %v2132
      %v2136 = vmul.f32 %v2121, %v2133
      %s2137 = scalar_lea.vmem %s191, 144
      %2138 = vst [vmem:[%s2137] sm:$0xff] %v2134
      %2139 = vst [vmem:[%s2137 + $0x8] sm:$0xff] %v2135
      %2140 = vst [vmem:[%s2137 + $0x10] sm:$0xff] %v2136
      %s2141 = scalar_lea.vmem %s179, 672
      %v2142 = vld [vmem:[%s2141] sm:$0xff]
      %v2143 = vld [vmem:[%s2141 + $0x8] sm:$0xff]
      %v2144 = vld [vmem:[%s2141 + $0x10] sm:$0xff]
      %v2145 = vld [vmem:[%s2141 + $0x18] sm:$0xff]
      %v2146 = vld [vmem:[%s2141 + $0x20] sm:$0xff]
      %v2147 = vld [vmem:[%s2141 + $0x28] sm:$0xff]
      %v2148 = vld [vmem:[%s2141 + $0x30] sm:$0xff]
      %v2149 = vld [vmem:[%s2141 + $0x38] sm:$0xff]
      %v2150 = vld [vmem:[%s2141 + $0x40] sm:$0xff]
      %v2151 = vld [vmem:[%s2141 + $0x48] sm:$0xff]
      %v2152 = vld [vmem:[%s2141 + $0x50] sm:$0xff]
      %v2153 = vld [vmem:[%s2141 + $0x58] sm:$0xff]
      %2154 = vmatprep.subr.mxu0 %v205
      %2155 = vmatpush1.msra.mxu0 %v204
      %2156 = vmatprep.subr.mxu0 %v209
      %2157 = vmatpush1.msra.mxu0 %v208
      %2158 = vmatprep.subr.mxu0 %v213
      %2159 = vmatpush1.msra.mxu0 %v212
      %2160 = vmatprep.subr.mxu0 %v217
      %2161 = vmatpush1.msra.mxu0 %v216
      %2162 = vmatprep.subr.mxu0 %v221
      %2163 = vmatpush1.msra.mxu0 %v220
      %2164 = vmatprep.subr.mxu0 %v225
      %2165 = vmatpush1.msra.mxu0 %v224
      %2166 = vmatprep.subr.mxu0 %v229
      %2167 = vmatpush1.msra.mxu0 %v228
      %2168 = vmatprep.subr.mxu0 %v233
      %2169 = vmatpush1.msra.mxu0 %v232
      %2170 = vmatprep.subr.mxu0 %v237
      %2171 = vmatpush1.msra.mxu0 %v236
      %2172 = vmatprep.subr.mxu0 %v241
      %2173 = vmatpush1.msra.mxu0 %v240
      %2174 = vmatprep.subr.mxu0 %v245
      %2175 = vmatpush1.msra.mxu0 %v244
      %2176 = vmatprep.subr.mxu0 %v249
      %2177 = vmatpush1.msra.mxu0 %v248
      %2178 = vmatprep.subr.mxu0 %v253
      %2179 = vmatpush1.msra.mxu0 %v252
      %2180 = vmatprep.subr.mxu0 %v257
      %2181 = vmatpush1.msra.mxu0 %v256
      %2182 = vmatprep.subr.mxu0 %v261
      %2183 = vmatpush1.msra.mxu0 %v260
      %2184 = vmatprep.subr.mxu0 %v265
      %2185 = vmatpush1.msra.mxu0 %v264
      %2186 = vmatprep.subr.mxu0 0.0
      %2187 = vmatpush1.msra.mxu0 0.0
      %2188 = vmatprep.subr.mxu0 0.0
      %2189 = vmatpush1.msra.mxu0 0.0
      %2190 = vmatprep.subr.mxu0 0.0
      %2191 = vmatpush1.msra.mxu0 0.0
      %2192 = vmatprep.subr.mxu0 0.0
      %2193 = vmatpush1.msra.mxu0 0.0
      %2194 = vmatprep.subr.mxu0 0.0
      %2195 = vmatpush1.msra.mxu0 0.0
      %2196 = vmatprep.subr.mxu0 0.0
      %2197 = vmatpush1.msra.mxu0 0.0
      %2198 = vmatprep.subr.mxu0 0.0
      %2199 = vmatpush1.msra.mxu0 0.0
      %2200 = vmatprep.subr.mxu0 0.0
      %2201 = vmatpush1.msra.mxu0 0.0
      %2202 = vmatprep.subr.mxu0 0.0
      %2203 = vmatpush1.msra.mxu0 0.0
      %2204 = vmatprep.subr.mxu0 0.0
      %2205 = vmatpush1.msra.mxu0 0.0
      %2206 = vmatprep.subr.mxu0 0.0
      %2207 = vmatpush1.msra.mxu0 0.0
      %2208 = vmatprep.subr.mxu0 0.0
      %2209 = vmatpush1.msra.mxu0 0.0
      %2210 = vmatprep.subr.mxu0 0.0
      %2211 = vmatpush1.msra.mxu0 0.0
      %2212 = vmatprep.subr.mxu0 0.0
      %2213 = vmatpush1.msra.mxu0 0.0
      %2214 = vmatprep.subr.mxu0 0.0
      %2215 = vmatpush1.msra.mxu0 0.0
      %2216 = vmatprep.subr.mxu0 0.0
      %2217 = vmatpush1.msra.mxu0 0.0
      %2218 = vmatprep.mubr.f32.mxu0 0.0
      %2219 = vmatmul.mubr.f32.gmra.mrb[0].mxu0 %v2134
      %v2220 = vpop.f32.mrb[0].mxu0
      %v2221 = vadd.f32 0.0, %v2220
      %v2222 = vpop.f32.mrb[0].mxu0
      %v2223 = vadd.f32 0.0, %v2222
      %2224 = vmatprep.mubr.f32.mxu0 0.0
      %2225 = vmatmul.mubr.f32.gmra.mrb[0].mxu0 %v2135
      %v2226 = vpop.f32.mrb[0].mxu0
      %v2227 = vadd.f32 0.0, %v2226
      %v2228 = vpop.f32.mrb[0].mxu0
      %v2229 = vadd.f32 0.0, %v2228
      %2230 = vmatprep.mubr.f32.mxu0 0.0
      %2231 = vmatmul.mubr.f32.gmra.mrb[0].mxu0 %v2136
      %v2232 = vpop.f32.mrb[0].mxu0
      %v2233 = vadd.f32 0.0, %v2232
      %v2234 = vpop.f32.mrb[0].mxu0
      %v2235 = vadd.f32 0.0, %v2234
      %2236 = vdwg.mxu0
      %2237 = vmatprep.subr.mxu0 %v207
      %2238 = vmatpush1.msra.mxu0 %v206
      %2239 = vmatprep.subr.mxu0 %v211
      %2240 = vmatpush1.msra.mxu0 %v210
      %2241 = vmatprep.subr.mxu0 %v215
      %2242 = vmatpush1.msra.mxu0 %v214
      %2243 = vmatprep.subr.mxu0 %v219
      %2244 = vmatpush1.msra.mxu0 %v218
      %2245 = vmatprep.subr.mxu0 %v223
      %2246 = vmatpush1.msra.mxu0 %v222
      %2247 = vmatprep.subr.mxu0 %v227
      %2248 = vmatpush1.msra.mxu0 %v226
      %2249 = vmatprep.subr.mxu0 %v231
      %2250 = vmatpush1.msra.mxu0 %v230
      %2251 = vmatprep.subr.mxu0 %v235
      %2252 = vmatpush1.msra.mxu0 %v234
      %2253 = vmatprep.subr.mxu0 %v239
      %2254 = vmatpush1.msra.mxu0 %v238
      %2255 = vmatprep.subr.mxu0 %v243
      %2256 = vmatpush1.msra.mxu0 %v242
      %2257 = vmatprep.subr.mxu0 %v247
      %2258 = vmatpush1.msra.mxu0 %v246
      %2259 = vmatprep.subr.mxu0 %v251
      %2260 = vmatpush1.msra.mxu0 %v250
      %2261 = vmatprep.subr.mxu0 %v255
      %2262 = vmatpush1.msra.mxu0 %v254
      %2263 = vmatprep.subr.mxu0 %v259
      %2264 = vmatpush1.msra.mxu0 %v258
      %2265 = vmatprep.subr.mxu0 %v263
      %2266 = vmatpush1.msra.mxu0 %v262
      %2267 = vmatprep.subr.mxu0 %v267
      %2268 = vmatpush1.msra.mxu0 %v266
      %2269 = vmatprep.subr.mxu0 0.0
      %2270 = vmatpush1.msra.mxu0 0.0
      %2271 = vmatprep.subr.mxu0 0.0
      %2272 = vmatpush1.msra.mxu0 0.0
      %2273 = vmatprep.subr.mxu0 0.0
      %2274 = vmatpush1.msra.mxu0 0.0
      %2275 = vmatprep.subr.mxu0 0.0
      %2276 = vmatpush1.msra.mxu0 0.0
      %2277 = vmatprep.subr.mxu0 0.0
      %2278 = vmatpush1.msra.mxu0 0.0
      %2279 = vmatprep.subr.mxu0 0.0
      %2280 = vmatpush1.msra.mxu0 0.0
      %2281 = vmatprep.subr.mxu0 0.0
      %2282 = vmatpush1.msra.mxu0 0.0
      %2283 = vmatprep.subr.mxu0 0.0
      %2284 = vmatpush1.msra.mxu0 0.0
      %2285 = vmatprep.subr.mxu0 0.0
      %2286 = vmatpush1.msra.mxu0 0.0
      %2287 = vmatprep.subr.mxu0 0.0
      %2288 = vmatpush1.msra.mxu0 0.0
      %2289 = vmatprep.subr.mxu0 0.0
      %2290 = vmatpush1.msra.mxu0 0.0
      %2291 = vmatprep.subr.mxu0 0.0
      %2292 = vmatpush1.msra.mxu0 0.0
      %2293 = vmatprep.subr.mxu0 0.0
      %2294 = vmatpush1.msra.mxu0 0.0
      %2295 = vmatprep.subr.mxu0 0.0
      %2296 = vmatpush1.msra.mxu0 0.0
      %2297 = vmatprep.subr.mxu0 0.0
      %2298 = vmatpush1.msra.mxu0 0.0
      %2299 = vmatprep.subr.mxu0 0.0
      %2300 = vmatpush1.msra.mxu0 0.0
      %2301 = vmatprep.mubr.f32.mxu0 0.0
      %2302 = vmatmul.mubr.f32.gmra.mrb[0].mxu0 %v2134
      %v2303 = vpop.f32.mrb[0].mxu0
      %v2304 = vadd.f32 0.0, %v2303
      %v2305 = vpop.f32.mrb[0].mxu0
      %v2306 = vadd.f32 0.0, %v2305
      %2307 = vmatprep.mubr.f32.mxu0 0.0
      %2308 = vmatmul.mubr.f32.gmra.mrb[0].mxu0 %v2135
      %v2309 = vpop.f32.mrb[0].mxu0
      %v2310 = vadd.f32 0.0, %v2309
      %v2311 = vpop.f32.mrb[0].mxu0
      %v2312 = vadd.f32 0.0, %v2311
      %2313 = vmatprep.mubr.f32.mxu0 0.0
      %2314 = vmatmul.mubr.f32.gmra.mrb[0].mxu0 %v2136
      %v2315 = vpop.f32.mrb[0].mxu0
      %v2316 = vadd.f32 0.0, %v2315
      %v2317 = vpop.f32.mrb[0].mxu0
      %v2318 = vadd.f32 0.0, %v2317
      %2319 = vdwg.mxu0
      %v2320 = vadd.f32 %v2142, %v2221
      %v2321 = vadd.f32 %v2143, %v2223
      %v2322 = vadd.f32 %v2144, %v2304
      %v2323 = vadd.f32 %v2145, %v2306
      %v2324 = vadd.f32 %v2146, %v2227
      %v2325 = vadd.f32 %v2147, %v2229
      %v2326 = vadd.f32 %v2148, %v2310
      %v2327 = vadd.f32 %v2149, %v2312
      %v2328 = vadd.f32 %v2150, %v2233
      %v2329 = vadd.f32 %v2151, %v2235
      %v2330 = vadd.f32 %v2152, %v2316
      %v2331 = vadd.f32 %v2153, %v2318
      %v2332 = vxor.u32 %v2320, 2147483648
      %v2333 = vxor.u32 %v2324, 2147483648
      %v2334 = vxor.u32 %v2328, 2147483648
      %v2335 = vmul.f32 %v2332, 1.442695
      %v2336 = vpow.pop %v2335
      %v2337 = vmul.f32 %v2333, 1.442695
      %v2338 = vpow.pop %v2337
      %v2339 = vmul.f32 %v2334, 1.442695
      %v2340 = vpow.pop %v2339
      %v2341 = vadd.f32 %v2336, 1.0
      %v2342 = vadd.f32 %v2338, 1.0
      %v2343 = vadd.f32 %v2340, 1.0
      %v2344 = vrcp.pop %v2341
      %v2345 = vmul.f32 1.0, %v2344
      %v2346 = vrcp.pop %v2342
      %v2347 = vmul.f32 1.0, %v2346
      %v2348 = vrcp.pop %v2343
      %v2349 = vmul.f32 1.0, %v2348
      %v2350 = vxor.u32 %v2321, 2147483648
      %v2351 = vxor.u32 %v2325, 2147483648
      %v2352 = vxor.u32 %v2329, 2147483648
      %v2353 = vmul.f32 %v2350, 1.442695
      %v2354 = vpow.pop %v2353
      %v2355 = vmul.f32 %v2351, 1.442695
      %v2356 = vpow.pop %v2355
      %v2357 = vmul.f32 %v2352, 1.442695
      %v2358 = vpow.pop %v2357
      %v2359 = vadd.f32 %v2354, 1.0
      %v2360 = vadd.f32 %v2356, 1.0
      %v2361 = vadd.f32 %v2358, 1.0
      %v2362 = vrcp.pop %v2359
      %v2363 = vmul.f32 1.0, %v2362
      %v2364 = vrcp.pop %v2360
      %v2365 = vmul.f32 1.0, %v2364
      %v2366 = vrcp.pop %v2361
      %v2367 = vmul.f32 1.0, %v2366
      %v2368 = vtanh.pop %v2322
      %v2369 = vtanh.pop %v2326
      %v2370 = vtanh.pop %v2330
      %v2371 = vxor.u32 %v2323, 2147483648
      %v2372 = vxor.u32 %v2327, 2147483648
      %v2373 = vxor.u32 %v2331, 2147483648
      %v2374 = vmul.f32 %v2371, 1.442695
      %v2375 = vpow.pop %v2374
      %v2376 = vmul.f32 %v2372, 1.442695
      %v2377 = vpow.pop %v2376
      %v2378 = vmul.f32 %v2373, 1.442695
      %v2379 = vpow.pop %v2378
      %v2380 = vadd.f32 %v2375, 1.0
      %v2381 = vadd.f32 %v2377, 1.0
      %v2382 = vadd.f32 %v2379, 1.0
      %v2383 = vrcp.pop %v2380
      %v2384 = vmul.f32 1.0, %v2383
      %v2385 = vrcp.pop %v2381
      %v2386 = vmul.f32 1.0, %v2385
      %v2387 = vrcp.pop %v2382
      %v2388 = vmul.f32 1.0, %v2387
      %v2389 = vmul.f32 %v2363, %v2128
      %v2390 = vmul.f32 %v2365, %v2129
      %v2391 = vmul.f32 %v2367, %v2130
      %v2392 = vmul.f32 %v2345, %v2368
      %v2393 = vmul.f32 %v2347, %v2369
      %v2394 = vmul.f32 %v2349, %v2370
      %v2395 = vadd.f32 %v2389, %v2392
      %v2396 = vadd.f32 %v2390, %v2393
      %v2397 = vadd.f32 %v2391, %v2394
      %v2398 = vtanh.pop %v2395
      %v2399 = vtanh.pop %v2396
      %v2400 = vtanh.pop %v2397
      %v2401 = vmul.f32 %v2384, %v2398
      %v2402 = vmul.f32 %v2386, %v2399
      %v2403 = vmul.f32 %v2388, %v2400
      %s2404 = scalar_lea.vmem %s191, 168
      %2405 = vst [vmem:[%s2404] sm:$0xff] %v2401
      %2406 = vst [vmem:[%s2404 + $0x8] sm:$0xff] %v2402
      %2407 = vst [vmem:[%s2404 + $0x10] sm:$0xff] %v2403
      %2408 = vst [vmem:[#allocation2] sm:$0xff] %v2401
      %2409 = vst [vmem:[#allocation2 + $0x8] sm:$0xff] %v2402
      %2410 = vst [vmem:[#allocation2 + $0x10] sm:$0xff] %v2403
      %2411 = vst [vmem:[#allocation3] sm:$0xff] %v2395
      %2412 = vst [vmem:[#allocation3 + $0x8] sm:$0xff] %v2396
      %2413 = vst [vmem:[#allocation3 + $0x10] sm:$0xff] %v2397
      %s2414 = smul.u32 8, %s18
      %s2415 = smul.u32 3, %s17
      %p2416 = scmp.lt.s32.totalorder %s2414, 15
      %s2417 = scalar_select %p2416, %s2414, 15
      %p2418 = scmp.lt.s32.totalorder %s2415, 2
      %s2419 = scalar_select %p2418, %s2415, 2
      %s2420 = smul.addr %s2417, 3
      %s2421 = sadd.s32 %s2419, %s2420
      %s2422 = smul.addr %s2421, 8
      %s2423 = scalar_lea.vmem %s2, %s2422
      // Predicated region
      $region33: #{cpu_lstm_model_pallas.1} parent=27 // pred_check
        %p2424 = pneg %p94
      $region34: #{cpu_lstm_model_pallas.1} parent=27 // pred_check_branch
        %2426 = sbr.rel (%p2424) target = $region36
      $region35: #{cpu_lstm_model_pallas.1} parent=27 // pred_region
        %s2427 = smul.u32 8, %s18
        %s2428 = smul.u32 3, %s17
      $region36: #{cpu_lstm_model_pallas.1} parent=27 // pred_fallthru
        _
    $region28: #{cpu_lstm_model_pallas.1} parent=5 // pred_fallthru
      _
    %p2429 = scmp.le.s32.totalorder 2, %s8
    // Predicated region
    $region37: #{cpu_lstm_model_pallas.1} parent=5 // pred_check
      %p2430 = pneg %p2429
    $region38: #{cpu_lstm_model_pallas.1} parent=5 // pred_check_branch
      %2432 = sbr.rel (%p2430) target = $region40
    $region39: #{cpu_lstm_model_pallas.1} parent=5 // pred_region
      %s2433 = ssub.s32 %s8, 2
      // Predicated region
      $region41: #{cpu_lstm_model_pallas.1} parent=39 // pred_check
        %p2434 = pneg %p100
      $region42: #{cpu_lstm_model_pallas.1} parent=39 // pred_check_branch
        %2436 = sbr.rel (%p2434) target = $region44
      $region43: #{cpu_lstm_model_pallas.1} parent=39 // pred_region
        %s2437 = smul.u32 8, %s20
        %s2438 = smul.u32 3, %s19
        %p2439 = scmp.lt.s32.totalorder %s2437, 15
        %s2440 = scalar_select %p2439, %s2437, 15
        %p2441 = scmp.lt.s32.totalorder %s2438, 2
        %s2442 = scalar_select %p2441, %s2438, 2
        %s2443 = smul.addr %s2440, 3
        %s2444 = sadd.s32 %s2442, %s2443
        %s2445 = smul.addr %s2444, 8
        %s2446 = scalar_lea.vmem %s2, %s2445
      $region44: #{cpu_lstm_model_pallas.1} parent=39 // pred_fallthru
        _
    $region40: #{cpu_lstm_model_pallas.1} parent=5 // pred_fallthru
      _
  $region6: #{cpu_lstm_model_pallas.1} parent=0 // loop_footer
    %s12 = sadd.s32 1, %s8
  $region7: #{cpu_lstm_model_pallas.1} parent=0 // loop_footer_branch
    %7 = sbr.rel target = $region3
  $region8: #{cpu_lstm_model_pallas.1} parent=0 // loop_exit
    _

</llo_original>
